<compile_context>
chip_gen: v6e
topology: v6e:2x2x1
jax: 0.10.0
libtpu: 0.0.40
codegen_flags: <defaults>
</compile_context>

<pallas_src>
import functools
import math

import jax
import jax.numpy as jnp
from jax import lax
from jax.experimental import pallas as pl
from jax.experimental.pallas import tpu as pltpu


def _mha_kernel(q_ref, k_ref, v_ref, wq_ref, bq_ref, wk_ref, bk_ref, o_ref,
                *, h, d_k, nshot, block_b):
    # q_ref : (block_b, P, D)           bf16
    # k_ref : (nshot, block_b, Pk, D)   bf16   (leading order (nshot, batch), as in torch)
    # v_ref : (block_b, 1, L)           f32    L = nshot * Pk
    # wq_ref: (h, D, d_k)               bf16   (1/sqrt(d_k) folded in)
    # bq_ref: (h, 1, d_k)               f32    (1/sqrt(d_k) folded in)
    # wk_ref: (h, D, d_k)               bf16
    # bk_ref: (h, 1, d_k)               f32
    # o_ref : (block_b, 1, P)           f32
    _, P, D = q_ref.shape
    Pk = k_ref.shape[2]
    L = nshot * Pk
    inv_h = 1.0 / h

    q_all = q_ref[...]            # (block_b, P, D)
    k_all = k_ref[...]            # (nshot, block_b, Pk, D)
    v_all = v_ref[...]            # (block_b, 1, L)
    wq = wq_ref[...]
    bq = bq_ref[...]
    wk = wk_ref[...]
    bk = bk_ref[...]

    # Static unroll over the batch elements of this block and over heads (both small).
    for b in range(block_b):
        q_b = q_all[b]                            # (P, D)  bf16
        k_b = k_all[:, b].reshape(L, D)           # (L, D)  bf16, l ordered (nshot, Pk)
        v_row = v_all[b]                          # (1, L)  f32

        acc = jnp.zeros((1, P), jnp.float32)
        for head in range(h):
            # Projections: bf16 MXU, f32 accumulation; bias added in f32.
            qh = jnp.dot(q_b, wq[head], preferred_element_type=jnp.float32) + bq[head]   # (P, d_k)
            kh = jnp.dot(k_b, wk[head], preferred_element_type=jnp.float32) + bk[head]   # (L, d_k)
            # Transposed scores: s[l, p] = sum_c kh[l, c] * qh[p, c]  (already / sqrt(d_k)).
            s = lax.dot_general(
                kh.astype(jnp.bfloat16), qh.astype(jnp.bfloat16),
                dimension_numbers=(((1,), (1,)), ((), ())),
                preferred_element_type=jnp.float32)                                      # (L, P)
            # Numerically stable softmax over keys (sublane axis); normalisation fused
            # into the value reduction.
            m = jnp.max(s, axis=0, keepdims=True)                                        # (1, P)
            e = jnp.exp(s - m)                                                           # (L, P)
            den = jnp.sum(e, axis=0, keepdims=True)                                      # (1, P)
            num = jnp.dot(v_row, e, preferred_element_type=jnp.float32)                  # (1, P)
            acc = acc + num * pl.reciprocal(den, approx=True)
        o_ref[b] = acc * inv_h                    # (1, P) lane-dense store


def _pick_block_b(B, cap=8):
    """Largest divisor of B that is <= cap, keeping >= 2 grid steps when B >= 2
    (so a v7x megacore can shard the parallel batch axis across both TensorCores)."""
    target = max(1, min(cap, B // 2)) if B >= 2 else 1
    for d in range(target, 0, -1):
        if B % d == 0:
            return d
    return 1


def multi_headed_attention(query, key, value, wq, bq, wk, bk, *, h, nshot=1, block_b=None):
    """Pallas forward pass. Returns (B, P, 1) float32."""
    B, P, D = query.shape
    NB, Pk, D2 = key.shape
    assert D2 == D and NB == nshot * B and D % h == 0
    d_k = D // h
    L = nshot * Pk
    assert value.shape == (B, L)

    if block_b is None:
        block_b = _pick_block_b(B)
    assert B % block_b == 0
    grid = (B // block_b,)

    # --- host-side (XLA) parameter prep: head-major weights, scale folded into the q path ---
    scale = 1.0 / math.sqrt(d_k)
    # PyTorch Linear: y = x @ W.T + b, W is (out, in); out features ordered (head, c).
    wq_heads = (wq.reshape(h, d_k, D) * scale).transpose(0, 2, 1).astype(jnp.bfloat16)  # (h, D, d_k)
    wk_heads = wk.reshape(h, d_k, D).transpose(0, 2, 1).astype(jnp.bfloat16)            # (h, D, d_k)
    bq_heads = (bq.astype(jnp.float32) * scale).reshape(h, 1, d_k)                      # (h, 1, d_k)
    bk_heads = bk.astype(jnp.float32).reshape(h, 1, d_k)                                # (h, 1, d_k)

    # key leading axis is ordered (nshot, B): free reshape, no host transpose / extra HBM pass.
    key_r = key.reshape(nshot, B, Pk, D).astype(jnp.bfloat16)
    q_bf = query.astype(jnp.bfloat16)
    v_r = value.astype(jnp.float32).reshape(B, 1, L)

    flops = (2 * B * P * D * D              # q projection
             + 2 * nshot * B * Pk * D * D   # k projection
             + 2 * B * h * P * L * d_k      # scores
             + 2 * B * h * P * L)           # value reduction
    cost = pl.CostEstimate(
        flops=int(flops),
        transcendentals=int(B * h * P * L + B * h * P),
        bytes_accessed=int(q_bf.size * 2 + key_r.size * 2 + v_r.size * 4
                           + wq_heads.size * 2 + wk_heads.size * 2
                           + bq_heads.size * 4 + bk_heads.size * 4 + B * P * 4))

    kernel = functools.partial(_mha_kernel, h=h, d_k=d_k, nshot=nshot, block_b=block_b)
    out = pl.pallas_call(
        kernel,
        out_shape=jax.ShapeDtypeStruct((B, 1, P), jnp.float32),
        grid=grid,
        in_specs=[
            pl.BlockSpec((block_b, P, D), lambda i: (i, 0, 0)),              # query
            pl.BlockSpec((nshot, block_b, Pk, D), lambda i: (0, i, 0, 0)),   # key
            pl.BlockSpec((block_b, 1, L), lambda i: (i, 0, 0)),              # value
            pl.BlockSpec((h, D, d_k), lambda i: (0, 0, 0)),                  # Wq (head-major)
            pl.BlockSpec((h, 1, d_k), lambda i: (0, 0, 0)),                  # bq
            pl.BlockSpec((h, D, d_k), lambda i: (0, 0, 0)),                  # Wk (head-major)
            pl.BlockSpec((h, 1, d_k), lambda i: (0, 0, 0)),                  # bk
        ],
        out_specs=pl.BlockSpec((block_b, 1, P), lambda i: (i, 0, 0)),
        compiler_params=pltpu.CompilerParams(
            dimension_semantics=("parallel",),
            # Tiny at test shapes; bf16 weights already halve the resident footprint.
            # For production d_model, raise this and/or single-buffer the weight specs.
            vmem_limit_bytes=32 * 1024 * 1024,
        ),
        cost_estimate=cost,
    )(q_bf, key_r, v_r, wq_heads, bq_heads, wk_heads, bk_heads)
    return out.reshape(B, P, 1)   # (B, 1, P) -> (B, P, 1): same element order, free reshape


def _reference(query, key, value, wq, bq, wk, bk, *, h, nshot=1):
    """Pure-JAX f32 replica of the PyTorch forward (eval mode, mask=None, no gaussian/bottle)."""
    B, P, D = query.shape
    d_k = D // h
    Pk = key.shape[1]
    q = query @ wq.T + bq
    k = key @ wk.T + bk
    q = q.reshape(B, P, h, d_k).transpose(0, 2, 1, 3)                        # b head p c
    k = (k.reshape(nshot, B, Pk, h, d_k)
          .transpose(1, 3, 0, 2, 4)
          .reshape(B, h, nshot * Pk, d_k))                                   # b head (n p) c
    scores = jnp.einsum('bhpc,bhlc->bhpl', q, k) / math.sqrt(d_k)
    p_attn = jax.nn.softmax(scores, axis=-1)
    v = jnp.broadcast_to(value[:, None, :, None], (B, h, nshot * Pk, 1))
    x = jnp.einsum('bhpl,bhlo->bhpo', p_attn, v)                             # (B, h, P, 1)
    return jnp.mean(x, axis=1)                                               # (B, P, 1)


if __name__ == "__main__":
    # small, module-consistent shapes
    B, P, Pk = 2, 8, 8
    d_model, h, nshot = 32, 4, 1

    key0 = jax.random.PRNGKey(0)
    k1, k2, k3, k4, k5, k6, k7 = jax.random.split(key0, 7)

    query = jax.random.normal(k1, (B, P, d_model), jnp.float32)
    keyx = jax.random.normal(k2, (nshot * B, Pk, d_model), jnp.float32)
    value = jax.random.normal(k3, (B, nshot * Pk), jnp.float32)

    # deterministic parameter init (nn.Linear(d_model, d_model): W (out,in), b (out,))
    scale = 1.0 / math.sqrt(d_model)
    wq = jax.random.uniform(k4, (d_model, d_model), jnp.float32, -scale, scale)
    bq = jax.random.uniform(k5, (d_model,), jnp.float32, -scale, scale)
    wk = jax.random.uniform(k6, (d_model, d_model), jnp.float32, -scale, scale)
    bk = jax.random.uniform(k7, (d_model,), jnp.float32, -scale, scale)
    # class_head (Linear(h, 2)) is unused in forward; dropout is identity in eval mode.

    out = multi_headed_attention(query, keyx, value, wq, bq, wk, bk, h=h, nshot=nshot)
    out = jax.block_until_ready(out)

    ref = _reference(query, keyx, value, wq, bq, wk, bk, h=h, nshot=nshot)
    assert out.shape == (B, P, 1), out.shape
    # bf16 MXU inputs with f32 accumulation -> ~1e-2 level agreement vs the pure-f32 reference.
    assert jnp.allclose(out, ref, atol=5e-2, rtol=5e-2), float(jnp.max(jnp.abs(out - ref)))

    print("KERNEL_OK")
</pallas_src>

<mosaic_0001>
module attributes {stable_mosaic.version = 11 : i64} {
  func.func @_mha_kernel(%arg0: i32, %arg1: memref<1x8x32xbf16, #tpu.memory_space<vmem>>, %arg2: memref<1x1x8x32xbf16, #tpu.memory_space<vmem>>, %arg3: memref<1x1x8xf32, #tpu.memory_space<vmem>>, %arg4: memref<4x32x8xbf16, #tpu.memory_space<vmem>>, %arg5: memref<4x1x8xf32, #tpu.memory_space<vmem>>, %arg6: memref<4x32x8xbf16, #tpu.memory_space<vmem>>, %arg7: memref<4x1x8xf32, #tpu.memory_space<vmem>>, %arg8: memref<1x1x8xf32, #tpu.memory_space<vmem>>) attributes {dimension_semantics = [#tpu.dimension_semantics<parallel>], iteration_bounds = array<i64: 2>, scalar_prefetch = 0 : i64, scratch_operands = 0 : i64, tpu.core_type = #tpu.core_type<tc>, window_params = [{transform_indices = @transform_0, window_bounds = array<i64: 1, 8, 32>}, {transform_indices = @transform_1, window_bounds = array<i64: 1, 1, 8, 32>}, {transform_indices = @transform_2, window_bounds = array<i64: 1, 1, 8>}, {pipeline_mode = #tpu.pipeline_mode<synchronous>, transform_indices = @transform_3, window_bounds = array<i64: 4, 32, 8>}, {pipeline_mode = #tpu.pipeline_mode<synchronous>, transform_indices = @transform_4, window_bounds = array<i64: 4, 1, 8>}, {pipeline_mode = #tpu.pipeline_mode<synchronous>, transform_indices = @transform_5, window_bounds = array<i64: 4, 32, 8>}, {pipeline_mode = #tpu.pipeline_mode<synchronous>, transform_indices = @transform_6, window_bounds = array<i64: 4, 1, 8>}, {transform_indices = @transform_7, window_bounds = array<i64: 1, 1, 8>}]} {
    %c0 = arith.constant 0 : index
    %c0_0 = arith.constant 0 : index
    %c0_1 = arith.constant 0 : index
    %0 = vector.load %arg1[%c0, %c0_0, %c0_1] : memref<1x8x32xbf16, #tpu.memory_space<vmem>>, vector<1x8x32xbf16>
    %c0_2 = arith.constant 0 : index
    %c0_3 = arith.constant 0 : index
    %c0_4 = arith.constant 0 : index
    %c0_5 = arith.constant 0 : index
    %1 = vector.load %arg2[%c0_2, %c0_3, %c0_4, %c0_5] : memref<1x1x8x32xbf16, #tpu.memory_space<vmem>>, vector<1x1x8x32xbf16>
    %c0_6 = arith.constant 0 : index
    %c0_7 = arith.constant 0 : index
    %c0_8 = arith.constant 0 : index
    %2 = vector.load %arg3[%c0_6, %c0_7, %c0_8] : memref<1x1x8xf32, #tpu.memory_space<vmem>>, vector<1x1x8xf32>
    %c0_9 = arith.constant 0 : index
    %c0_10 = arith.constant 0 : index
    %c0_11 = arith.constant 0 : index
    %3 = vector.load %arg4[%c0_9, %c0_10, %c0_11] : memref<4x32x8xbf16, #tpu.memory_space<vmem>>, vector<4x32x8xbf16>
    %c0_12 = arith.constant 0 : index
    %c0_13 = arith.constant 0 : index
    %c0_14 = arith.constant 0 : index
    %4 = vector.load %arg5[%c0_12, %c0_13, %c0_14] : memref<4x1x8xf32, #tpu.memory_space<vmem>>, vector<4x1x8xf32>
    %c0_15 = arith.constant 0 : index
    %c0_16 = arith.constant 0 : index
    %c0_17 = arith.constant 0 : index
    %5 = vector.load %arg6[%c0_15, %c0_16, %c0_17] : memref<4x32x8xbf16, #tpu.memory_space<vmem>>, vector<4x32x8xbf16>
    %c0_18 = arith.constant 0 : index
    %c0_19 = arith.constant 0 : index
    %c0_20 = arith.constant 0 : index
    %6 = vector.load %arg7[%c0_18, %c0_19, %c0_20] : memref<4x1x8xf32, #tpu.memory_space<vmem>>, vector<4x1x8xf32>
    %7 = vector.shape_cast %0 : vector<1x8x32xbf16> to vector<8x32xbf16>
    %8 = vector.shape_cast %1 : vector<1x1x8x32xbf16> to vector<1x8x32xbf16>
    %9 = vector.shape_cast %8 : vector<1x8x32xbf16> to vector<8x32xbf16>
    %10 = vector.shape_cast %2 : vector<1x1x8xf32> to vector<1x8xf32>
    %cst = arith.constant 0.000000e+00 : f32
    %11 = vector.broadcast %cst : f32 to vector<1x8xf32>
    %12 = vector.extract_strided_slice %3 {offsets = [0, 0, 0], sizes = [1, 32, 8], strides = [1, 1, 1]} : vector<4x32x8xbf16> to vector<1x32x8xbf16>
    %13 = vector.shape_cast %12 : vector<1x32x8xbf16> to vector<32x8xbf16>
    %cst_21 = arith.constant dense<0.000000e+00> : vector<8x8xf32>
    %14 = tpu.matmul %7, %13, %cst_21 {dimension_numbers = #tpu.dot_dimension_numbers<[1], [0], [0], [1], [0, 0, 1, 1], [], []>} : vector<8x32xbf16>, vector<32x8xbf16>, vector<8x8xf32> -> vector<8x8xf32>
    %15 = vector.extract_strided_slice %4 {offsets = [0, 0, 0], sizes = [1, 1, 8], strides = [1, 1, 1]} : vector<4x1x8xf32> to vector<1x1x8xf32>
    %16 = vector.shape_cast %15 : vector<1x1x8xf32> to vector<1x8xf32>
    %17 = vector.broadcast %16 : vector<1x8xf32> to vector<8x8xf32>
    %18 = arith.addf %14, %17 : vector<8x8xf32>
    %19 = vector.extract_strided_slice %5 {offsets = [0, 0, 0], sizes = [1, 32, 8], strides = [1, 1, 1]} : vector<4x32x8xbf16> to vector<1x32x8xbf16>
    %20 = vector.shape_cast %19 : vector<1x32x8xbf16> to vector<32x8xbf16>
    %cst_22 = arith.constant dense<0.000000e+00> : vector<8x8xf32>
    %21 = tpu.matmul %9, %20, %cst_22 {dimension_numbers = #tpu.dot_dimension_numbers<[1], [0], [0], [1], [0, 0, 1, 1], [], []>} : vector<8x32xbf16>, vector<32x8xbf16>, vector<8x8xf32> -> vector<8x8xf32>
    %22 = vector.extract_strided_slice %6 {offsets = [0, 0, 0], sizes = [1, 1, 8], strides = [1, 1, 1]} : vector<4x1x8xf32> to vector<1x1x8xf32>
    %23 = vector.shape_cast %22 : vector<1x1x8xf32> to vector<1x8xf32>
    %24 = vector.broadcast %23 : vector<1x8xf32> to vector<8x8xf32>
    %25 = arith.addf %21, %24 : vector<8x8xf32>
    %26 = arith.truncf %25 : vector<8x8xf32> to vector<8x8xbf16>
    %27 = arith.truncf %18 : vector<8x8xf32> to vector<8x8xbf16>
    %cst_23 = arith.constant dense<0.000000e+00> : vector<8x8xf32>
    %28 = tpu.matmul %26, %27, %cst_23 {dimension_numbers = #tpu.dot_dimension_numbers<[1], [1], [0], [0], [0, 0, 1, 0], [], []>} : vector<8x8xbf16>, vector<8x8xbf16>, vector<8x8xf32> -> vector<8x8xf32>
    %cst_24 = arith.constant dense<0xFF800000> : vector<8xf32>
    %29 = vector.multi_reduction <maximumf>, %28, %cst_24 [0] : vector<8x8xf32> to vector<8xf32>
    %30 = vector.shape_cast %29 : vector<8xf32> to vector<1x8xf32>
    %31 = vector.broadcast %30 : vector<1x8xf32> to vector<8x8xf32>
    %32 = arith.subf %28, %31 : vector<8x8xf32>
    %33 = math.exp %32 : vector<8x8xf32>
    %cst_25 = arith.constant dense<0.000000e+00> : vector<8xf32>
    %34 = vector.multi_reduction <add>, %33, %cst_25 [0] : vector<8x8xf32> to vector<8xf32>
    %35 = vector.shape_cast %34 : vector<8xf32> to vector<1x8xf32>
    %cst_26 = arith.constant dense<0.000000e+00> : vector<1x8xf32>
    %36 = tpu.matmul %10, %33, %cst_26 {dimension_numbers = #tpu.dot_dimension_numbers<[1], [0], [0], [1], [0, 0, 1, 1], [], []>} : vector<1x8xf32>, vector<8x8xf32>, vector<1x8xf32> -> vector<1x8xf32>
    %37 = tpu.reciprocal %35 {approx = true} : vector<1x8xf32> -> vector<1x8xf32>
    %38 = arith.mulf %36, %37 : vector<1x8xf32>
    %39 = arith.addf %11, %38 : vector<1x8xf32>
    %40 = vector.extract_strided_slice %3 {offsets = [1, 0, 0], sizes = [1, 32, 8], strides = [1, 1, 1]} : vector<4x32x8xbf16> to vector<1x32x8xbf16>
    %41 = vector.shape_cast %40 : vector<1x32x8xbf16> to vector<32x8xbf16>
    %cst_27 = arith.constant dense<0.000000e+00> : vector<8x8xf32>
    %42 = tpu.matmul %7, %41, %cst_27 {dimension_numbers = #tpu.dot_dimension_numbers<[1], [0], [0], [1], [0, 0, 1, 1], [], []>} : vector<8x32xbf16>, vector<32x8xbf16>, vector<8x8xf32> -> vector<8x8xf32>
    %43 = vector.extract_strided_slice %4 {offsets = [1, 0, 0], sizes = [1, 1, 8], strides = [1, 1, 1]} : vector<4x1x8xf32> to vector<1x1x8xf32>
    %44 = vector.shape_cast %43 : vector<1x1x8xf32> to vector<1x8xf32>
    %45 = vector.broadcast %44 : vector<1x8xf32> to vector<8x8xf32>
    %46 = arith.addf %42, %45 : vector<8x8xf32>
    %47 = vector.extract_strided_slice %5 {offsets = [1, 0, 0], sizes = [1, 32, 8], strides = [1, 1, 1]} : vector<4x32x8xbf16> to vector<1x32x8xbf16>
    %48 = vector.shape_cast %47 : vector<1x32x8xbf16> to vector<32x8xbf16>
    %cst_28 = arith.constant dense<0.000000e+00> : vector<8x8xf32>
    %49 = tpu.matmul %9, %48, %cst_28 {dimension_numbers = #tpu.dot_dimension_numbers<[1], [0], [0], [1], [0, 0, 1, 1], [], []>} : vector<8x32xbf16>, vector<32x8xbf16>, vector<8x8xf32> -> vector<8x8xf32>
    %50 = vector.extract_strided_slice %6 {offsets = [1, 0, 0], sizes = [1, 1, 8], strides = [1, 1, 1]} : vector<4x1x8xf32> to vector<1x1x8xf32>
    %51 = vector.shape_cast %50 : vector<1x1x8xf32> to vector<1x8xf32>
    %52 = vector.broadcast %51 : vector<1x8xf32> to vector<8x8xf32>
    %53 = arith.addf %49, %52 : vector<8x8xf32>
    %54 = arith.truncf %53 : vector<8x8xf32> to vector<8x8xbf16>
    %55 = arith.truncf %46 : vector<8x8xf32> to vector<8x8xbf16>
    %cst_29 = arith.constant dense<0.000000e+00> : vector<8x8xf32>
    %56 = tpu.matmul %54, %55, %cst_29 {dimension_numbers = #tpu.dot_dimension_numbers<[1], [1], [0], [0], [0, 0, 1, 0], [], []>} : vector<8x8xbf16>, vector<8x8xbf16>, vector<8x8xf32> -> vector<8x8xf32>
    %cst_30 = arith.constant dense<0xFF800000> : vector<8xf32>
    %57 = vector.multi_reduction <maximumf>, %56, %cst_30 [0] : vector<8x8xf32> to vector<8xf32>
    %58 = vector.shape_cast %57 : vector<8xf32> to vector<1x8xf32>
    %59 = vector.broadcast %58 : vector<1x8xf32> to vector<8x8xf32>
    %60 = arith.subf %56, %59 : vector<8x8xf32>
    %61 = math.exp %60 : vector<8x8xf32>
    %cst_31 = arith.constant dense<0.000000e+00> : vector<8xf32>
    %62 = vector.multi_reduction <add>, %61, %cst_31 [0] : vector<8x8xf32> to vector<8xf32>
    %63 = vector.shape_cast %62 : vector<8xf32> to vector<1x8xf32>
    %cst_32 = arith.constant dense<0.000000e+00> : vector<1x8xf32>
    %64 = tpu.matmul %10, %61, %cst_32 {dimension_numbers = #tpu.dot_dimension_numbers<[1], [0], [0], [1], [0, 0, 1, 1], [], []>} : vector<1x8xf32>, vector<8x8xf32>, vector<1x8xf32> -> vector<1x8xf32>
    %65 = tpu.reciprocal %63 {approx = true} : vector<1x8xf32> -> vector<1x8xf32>
    %66 = arith.mulf %64, %65 : vector<1x8xf32>
    %67 = arith.addf %39, %66 : vector<1x8xf32>
    %68 = vector.extract_strided_slice %3 {offsets = [2, 0, 0], sizes = [1, 32, 8], strides = [1, 1, 1]} : vector<4x32x8xbf16> to vector<1x32x8xbf16>
    %69 = vector.shape_cast %68 : vector<1x32x8xbf16> to vector<32x8xbf16>
    %cst_33 = arith.constant dense<0.000000e+00> : vector<8x8xf32>
    %70 = tpu.matmul %7, %69, %cst_33 {dimension_numbers = #tpu.dot_dimension_numbers<[1], [0], [0], [1], [0, 0, 1, 1], [], []>} : vector<8x32xbf16>, vector<32x8xbf16>, vector<8x8xf32> -> vector<8x8xf32>
    %71 = vector.extract_strided_slice %4 {offsets = [2, 0, 0], sizes = [1, 1, 8], strides = [1, 1, 1]} : vector<4x1x8xf32> to vector<1x1x8xf32>
    %72 = vector.shape_cast %71 : vector<1x1x8xf32> to vector<1x8xf32>
    %73 = vector.broadcast %72 : vector<1x8xf32> to vector<8x8xf32>
    %74 = arith.addf %70, %73 : vector<8x8xf32>
    %75 = vector.extract_strided_slice %5 {offsets = [2, 0, 0], sizes = [1, 32, 8], strides = [1, 1, 1]} : vector<4x32x8xbf16> to vector<1x32x8xbf16>
    %76 = vector.shape_cast %75 : vector<1x32x8xbf16> to vector<32x8xbf16>
    %cst_34 = arith.constant dense<0.000000e+00> : vector<8x8xf32>
    %77 = tpu.matmul %9, %76, %cst_34 {dimension_numbers = #tpu.dot_dimension_numbers<[1], [0], [0], [1], [0, 0, 1, 1], [], []>} : vector<8x32xbf16>, vector<32x8xbf16>, vector<8x8xf32> -> vector<8x8xf32>
    %78 = vector.extract_strided_slice %6 {offsets = [2, 0, 0], sizes = [1, 1, 8], strides = [1, 1, 1]} : vector<4x1x8xf32> to vector<1x1x8xf32>
    %79 = vector.shape_cast %78 : vector<1x1x8xf32> to vector<1x8xf32>
    %80 = vector.broadcast %79 : vector<1x8xf32> to vector<8x8xf32>
    %81 = arith.addf %77, %80 : vector<8x8xf32>
    %82 = arith.truncf %81 : vector<8x8xf32> to vector<8x8xbf16>
    %83 = arith.truncf %74 : vector<8x8xf32> to vector<8x8xbf16>
    %cst_35 = arith.constant dense<0.000000e+00> : vector<8x8xf32>
    %84 = tpu.matmul %82, %83, %cst_35 {dimension_numbers = #tpu.dot_dimension_numbers<[1], [1], [0], [0], [0, 0, 1, 0], [], []>} : vector<8x8xbf16>, vector<8x8xbf16>, vector<8x8xf32> -> vector<8x8xf32>
    %cst_36 = arith.constant dense<0xFF800000> : vector<8xf32>
    %85 = vector.multi_reduction <maximumf>, %84, %cst_36 [0] : vector<8x8xf32> to vector<8xf32>
    %86 = vector.shape_cast %85 : vector<8xf32> to vector<1x8xf32>
    %87 = vector.broadcast %86 : vector<1x8xf32> to vector<8x8xf32>
    %88 = arith.subf %84, %87 : vector<8x8xf32>
    %89 = math.exp %88 : vector<8x8xf32>
    %cst_37 = arith.constant dense<0.000000e+00> : vector<8xf32>
    %90 = vector.multi_reduction <add>, %89, %cst_37 [0] : vector<8x8xf32> to vector<8xf32>
    %91 = vector.shape_cast %90 : vector<8xf32> to vector<1x8xf32>
    %cst_38 = arith.constant dense<0.000000e+00> : vector<1x8xf32>
    %92 = tpu.matmul %10, %89, %cst_38 {dimension_numbers = #tpu.dot_dimension_numbers<[1], [0], [0], [1], [0, 0, 1, 1], [], []>} : vector<1x8xf32>, vector<8x8xf32>, vector<1x8xf32> -> vector<1x8xf32>
    %93 = tpu.reciprocal %91 {approx = true} : vector<1x8xf32> -> vector<1x8xf32>
    %94 = arith.mulf %92, %93 : vector<1x8xf32>
    %95 = arith.addf %67, %94 : vector<1x8xf32>
    %96 = vector.extract_strided_slice %3 {offsets = [3, 0, 0], sizes = [1, 32, 8], strides = [1, 1, 1]} : vector<4x32x8xbf16> to vector<1x32x8xbf16>
    %97 = vector.shape_cast %96 : vector<1x32x8xbf16> to vector<32x8xbf16>
    %cst_39 = arith.constant dense<0.000000e+00> : vector<8x8xf32>
    %98 = tpu.matmul %7, %97, %cst_39 {dimension_numbers = #tpu.dot_dimension_numbers<[1], [0], [0], [1], [0, 0, 1, 1], [], []>} : vector<8x32xbf16>, vector<32x8xbf16>, vector<8x8xf32> -> vector<8x8xf32>
    %99 = vector.extract_strided_slice %4 {offsets = [3, 0, 0], sizes = [1, 1, 8], strides = [1, 1, 1]} : vector<4x1x8xf32> to vector<1x1x8xf32>
    %100 = vector.shape_cast %99 : vector<1x1x8xf32> to vector<1x8xf32>
    %101 = vector.broadcast %100 : vector<1x8xf32> to vector<8x8xf32>
    %102 = arith.addf %98, %101 : vector<8x8xf32>
    %103 = vector.extract_strided_slice %5 {offsets = [3, 0, 0], sizes = [1, 32, 8], strides = [1, 1, 1]} : vector<4x32x8xbf16> to vector<1x32x8xbf16>
    %104 = vector.shape_cast %103 : vector<1x32x8xbf16> to vector<32x8xbf16>
    %cst_40 = arith.constant dense<0.000000e+00> : vector<8x8xf32>
    %105 = tpu.matmul %9, %104, %cst_40 {dimension_numbers = #tpu.dot_dimension_numbers<[1], [0], [0], [1], [0, 0, 1, 1], [], []>} : vector<8x32xbf16>, vector<32x8xbf16>, vector<8x8xf32> -> vector<8x8xf32>
    %106 = vector.extract_strided_slice %6 {offsets = [3, 0, 0], sizes = [1, 1, 8], strides = [1, 1, 1]} : vector<4x1x8xf32> to vector<1x1x8xf32>
    %107 = vector.shape_cast %106 : vector<1x1x8xf32> to vector<1x8xf32>
    %108 = vector.broadcast %107 : vector<1x8xf32> to vector<8x8xf32>
    %109 = arith.addf %105, %108 : vector<8x8xf32>
    %110 = arith.truncf %109 : vector<8x8xf32> to vector<8x8xbf16>
    %111 = arith.truncf %102 : vector<8x8xf32> to vector<8x8xbf16>
    %cst_41 = arith.constant dense<0.000000e+00> : vector<8x8xf32>
    %112 = tpu.matmul %110, %111, %cst_41 {dimension_numbers = #tpu.dot_dimension_numbers<[1], [1], [0], [0], [0, 0, 1, 0], [], []>} : vector<8x8xbf16>, vector<8x8xbf16>, vector<8x8xf32> -> vector<8x8xf32>
    %cst_42 = arith.constant dense<0xFF800000> : vector<8xf32>
    %113 = vector.multi_reduction <maximumf>, %112, %cst_42 [0] : vector<8x8xf32> to vector<8xf32>
    %114 = vector.shape_cast %113 : vector<8xf32> to vector<1x8xf32>
    %115 = vector.broadcast %114 : vector<1x8xf32> to vector<8x8xf32>
    %116 = arith.subf %112, %115 : vector<8x8xf32>
    %117 = math.exp %116 : vector<8x8xf32>
    %cst_43 = arith.constant dense<0.000000e+00> : vector<8xf32>
    %118 = vector.multi_reduction <add>, %117, %cst_43 [0] : vector<8x8xf32> to vector<8xf32>
    %119 = vector.shape_cast %118 : vector<8xf32> to vector<1x8xf32>
    %cst_44 = arith.constant dense<0.000000e+00> : vector<1x8xf32>
    %120 = tpu.matmul %10, %117, %cst_44 {dimension_numbers = #tpu.dot_dimension_numbers<[1], [0], [0], [1], [0, 0, 1, 1], [], []>} : vector<1x8xf32>, vector<8x8xf32>, vector<1x8xf32> -> vector<1x8xf32>
    %121 = tpu.reciprocal %119 {approx = true} : vector<1x8xf32> -> vector<1x8xf32>
    %122 = arith.mulf %120, %121 : vector<1x8xf32>
    %123 = arith.addf %95, %122 : vector<1x8xf32>
    %cst_45 = arith.constant 2.500000e-01 : f32
    %124 = vector.broadcast %cst_45 : f32 to vector<1x8xf32>
    %125 = arith.mulf %123, %124 : vector<1x8xf32>
    %c0_46 = arith.constant 0 : index
    %c0_47 = arith.constant 0 : index
    %c0_48 = arith.constant 0 : index
    %126 = vector.load %arg8[%c0_46, %c0_47, %c0_48] : memref<1x1x8xf32, #tpu.memory_space<vmem>>, vector<1x1x8xf32>
    %127 = vector.shape_cast %126 : vector<1x1x8xf32> to vector<1x8xf32>
    %128 = vector.shape_cast %125 : vector<1x8xf32> to vector<1x1x8xf32>
    tpu.vector_store %arg8[%c0_46, %c0_47, %c0_48], %128 {strides = array<i32>} : memref<1x1x8xf32, #tpu.memory_space<vmem>>, vector<1x1x8xf32>,
    return
  }
  func.func @transform_0(%arg0: i32) -> (i32, i32, i32) {
    %c0_i32 = arith.constant 0 : i32
    %c0_i32_0 = arith.constant 0 : i32
    %c0_i32_1 = arith.constant 0 : i32
    return %arg0, %c0_i32, %c0_i32_0 : i32, i32, i32
  }
  func.func @transform_1(%arg0: i32) -> (i32, i32, i32, i32) {
    %c0_i32 = arith.constant 0 : i32
    %c0_i32_0 = arith.constant 0 : i32
    %c0_i32_1 = arith.constant 0 : i32
    %c0_i32_2 = arith.constant 0 : i32
    return %c0_i32, %arg0, %c0_i32_0, %c0_i32_1 : i32, i32, i32, i32
  }
  func.func @transform_2(%arg0: i32) -> (i32, i32, i32) {
    %c0_i32 = arith.constant 0 : i32
    %c0_i32_0 = arith.constant 0 : i32
    %c0_i32_1 = arith.constant 0 : i32
    return %arg0, %c0_i32, %c0_i32_0 : i32, i32, i32
  }
  func.func @transform_3(%arg0: i32) -> (i32, i32, i32) {
    %c0_i32 = arith.constant 0 : i32
    %c0_i32_0 = arith.constant 0 : i32
    %c0_i32_1 = arith.constant 0 : i32
    %c0_i32_2 = arith.constant 0 : i32
    return %c0_i32, %c0_i32_0, %c0_i32_1 : i32, i32, i32
  }
  func.func @transform_4(%arg0: i32) -> (i32, i32, i32) {
    %c0_i32 = arith.constant 0 : i32
    %c0_i32_0 = arith.constant 0 : i32
    %c0_i32_1 = arith.constant 0 : i32
    %c0_i32_2 = arith.constant 0 : i32
    return %c0_i32, %c0_i32_0, %c0_i32_1 : i32, i32, i32
  }
  func.func @transform_5(%arg0: i32) -> (i32, i32, i32) {
    %c0_i32 = arith.constant 0 : i32
    %c0_i32_0 = arith.constant 0 : i32
    %c0_i32_1 = arith.constant 0 : i32
    %c0_i32_2 = arith.constant 0 : i32
    return %c0_i32, %c0_i32_0, %c0_i32_1 : i32, i32, i32
  }
  func.func @transform_6(%arg0: i32) -> (i32, i32, i32) {
    %c0_i32 = arith.constant 0 : i32
    %c0_i32_0 = arith.constant 0 : i32
    %c0_i32_1 = arith.constant 0 : i32
    %c0_i32_2 = arith.constant 0 : i32
    return %c0_i32, %c0_i32_0, %c0_i32_1 : i32, i32, i32
  }
  func.func @transform_7(%arg0: i32) -> (i32, i32, i32) {
    %c0_i32 = arith.constant 0 : i32
    %c0_i32_0 = arith.constant 0 : i32
    %c0_i32_1 = arith.constant 0 : i32
    return %arg0, %c0_i32, %c0_i32_0 : i32, i32, i32
  }
}

</mosaic_0001>

<llo_original>
// kernel: tpu_custom_call.1
$region0: #{tpu_custom_call.1}
  #allocation0 [shape = 'u32[]', space=smem, size = 0x4, offset = 0x4, fixed_abs, tag = 'smem constant byte address 0x4 - core index']
  #allocation1 [shape = 'u32[144,128]{1,0:T(1,128)}', space=vmem, size = 0x12000, scoped, tag = 'internal scratch']
  %s0 = inlined_call_operand.vmem [shape: bf16[2,8,32], index: 0, kind: input, shape index: {}]
  %s1 = inlined_call_operand.vmem [shape: bf16[1,2,8,32], index: 1, kind: input, shape index: {}]
  %s2 = inlined_call_operand.vmem [shape: f32[2,1,8], index: 2, kind: input, shape index: {}]
  %s3 = inlined_call_operand.vmem [shape: bf16[4,32,8], index: 3, kind: input, shape index: {}]
  %s4 = inlined_call_operand.vmem [shape: f32[4,1,8], index: 4, kind: input, shape index: {}]
  %s5 = inlined_call_operand.vmem [shape: bf16[4,32,8], index: 5, kind: input, shape index: {}]
  %s6 = inlined_call_operand.vmem [shape: f32[4,1,8], index: 6, kind: input, shape index: {}]
  %s7 = inlined_call_operand.hbm [shape: f32[2,1,8], index: 7, kind: output, shape index: {}]
  %s8 = sld [smem:[#allocation0]]
  $region61: #{tpu_custom_call.1} parent=0
    _
  %s10 = ssub.s32 1, %s8
  %s11 = scalar_select 0, %s10, %s8
  $region1: #{tpu_custom_call.1} parent=0
    #allocation2 [shape = 'u8[1024]{0}', space=vmem, size = 0x400, scoped, tag = 'output window, operand 0']
    #allocation3 [shape = 's32[2]{0}', space=sflag, size = 0x8, scoped, tag = 'scoped memory for tpu_custom_call.1']
    %12 = vsyncpa [#allocation3], 0
    %s13 = scalar_lea.sflag [#allocation3], 1
    %14 = vsyncpa %s13, 0
    loop: start=0, step=1, limit=4
    $region2: #{tpu_custom_call.1} parent=1 // loop_pre_header
      _
    $region3: #{tpu_custom_call.1} parent=1 // loop_header
      %s16 = sphi 0, %s20
      %p17 = scmp.ge.s32.totalorder %s16, 4
      %s26 = sphi 0, %s28
      %s29 = sphi 0, %s26
      %s30 = sphi 0, %s29
      %s46 = sphi 0, %s30
      %s52 = sphi 0, %s54
      %s55 = sphi 0, %s52
      %s56 = sphi 0, %s55
      %s72 = sphi 0, %s56
      %s78 = sphi 0, %s80
      %s81 = sphi 0, %s78
      %s82 = sphi 0, %s81
      %s98 = sphi 0, %s82
      %s102 = sphi 0, %s102
      %s104 = sphi 0, %s102
      %s105 = sphi 0, %s104
      %s119 = sphi 0, %s105
      %s123 = sphi 0, %s123
      %s125 = sphi 0, %s123
      %s126 = sphi 0, %s125
      %s140 = sphi 0, %s126
      %s144 = sphi 0, %s144
      %s146 = sphi 0, %s144
      %s147 = sphi 0, %s146
      %s161 = sphi 0, %s147
      %s165 = sphi 0, %s165
      %s167 = sphi 0, %s165
      %s168 = sphi 0, %s167
      %s182 = sphi 0, %s168
      %s188 = sphi 0, %s190
      %s191 = sphi 0, %s188
      %s192 = sphi 0, %s191
      %s208 = sphi 0, %s192
    $region4: #{tpu_custom_call.1} parent=1 // loop_header_branch
      %19 = sbr.rel (%p17) target = $region8
    $region5: #{tpu_custom_call.1} parent=1 // loop_body
      %s21 = ssub.s32 %s16, 1
      %s22 = ssub.s32 %s16, 2
      %s23 = sadd.s32 %s16, 1
      %s24 = ssub.s32 %s16, %s23
      %p25 = scmp.eq.s32.totalorder %s24, 0
      %s27 = sadd.s32 %s26, 1
      %s28 = scalar_select %p25, %s26, %s27
      %p31 = pneg %p25
      %p32 = scmp.eq.s32.totalorder %s16, 1
      %p33 = por %p31, %p32
      %p34 = scmp.ne.s32.totalorder %s26, %s29
      %p35 = scmp.eq.s32.totalorder %s16, 0
      %p36 = por %p34, %p35
      %p37 = scmp.ne.s32.totalorder %s26, %s29
      %p38 = scmp.eq.s32.totalorder %s21, 1
      %p39 = por %p37, %p38
      %p40 = scmp.ne.s32.totalorder %s29, %s30
      %p41 = scmp.eq.s32.totalorder %s21, 0
      %p42 = por %p40, %p41
      %p43 = scmp.ne.s32.totalorder %s29, %s30
      %p44 = scmp.eq.s32.totalorder %s22, 1
      %p45 = por %p43, %p44
      %p47 = scmp.ne.s32.totalorder %s30, %s46
      %p48 = scmp.eq.s32.totalorder %s22, 0
      %p49 = por %p47, %p48
      %s50 = ssub.s32 %s16, %s23
      %p51 = scmp.eq.s32.totalorder %s50, 0
      %s53 = sadd.s32 %s52, 1
      %s54 = scalar_select %p51, %s52, %s53
      %p57 = pneg %p51
      %p58 = scmp.eq.s32.totalorder %s16, 1
      %p59 = por %p57, %p58
      %p60 = scmp.ne.s32.totalorder %s52, %s55
      %p61 = scmp.eq.s32.totalorder %s16, 0
      %p62 = por %p60, %p61
      %p63 = scmp.ne.s32.totalorder %s52, %s55
      %p64 = scmp.eq.s32.totalorder %s21, 1
      %p65 = por %p63, %p64
      %p66 = scmp.ne.s32.totalorder %s55, %s56
      %p67 = scmp.eq.s32.totalorder %s21, 0
      %p68 = por %p66, %p67
      %p69 = scmp.ne.s32.totalorder %s55, %s56
      %p70 = scmp.eq.s32.totalorder %s22, 1
      %p71 = por %p69, %p70
      %p73 = scmp.ne.s32.totalorder %s56, %s72
      %p74 = scmp.eq.s32.totalorder %s22, 0
      %p75 = por %p73, %p74
      %s76 = ssub.s32 %s16, %s23
      %p77 = scmp.eq.s32.totalorder %s76, 0
      %s79 = sadd.s32 %s78, 1
      %s80 = scalar_select %p77, %s78, %s79
      %p83 = pneg %p77
      %p84 = scmp.eq.s32.totalorder %s16, 1
      %p85 = por %p83, %p84
      %p86 = scmp.ne.s32.totalorder %s78, %s81
      %p87 = scmp.eq.s32.totalorder %s16, 0
      %p88 = por %p86, %p87
      %p89 = scmp.ne.s32.totalorder %s78, %s81
      %p90 = scmp.eq.s32.totalorder %s21, 1
      %p91 = por %p89, %p90
      %p92 = scmp.ne.s32.totalorder %s81, %s82
      %p93 = scmp.eq.s32.totalorder %s21, 0
      %p94 = por %p92, %p93
      %p95 = scmp.ne.s32.totalorder %s81, %s82
      %p96 = scmp.eq.s32.totalorder %s22, 1
      %p97 = por %p95, %p96
      %p99 = scmp.ne.s32.totalorder %s82, %s98
      %p100 = scmp.eq.s32.totalorder %s22, 0
      %p101 = por %p99, %p100
      %s103 = sadd.s32 %s102, 1
      %p106 = scmp.eq.s32.totalorder %s16, 1
      %p107 = scmp.ne.s32.totalorder %s102, %s104
      %p108 = scmp.eq.s32.totalorder %s16, 0
      %p109 = por %p107, %p108
      %p110 = scmp.ne.s32.totalorder %s102, %s104
      %p111 = scmp.eq.s32.totalorder %s21, 1
      %p112 = por %p110, %p111
      %p113 = scmp.ne.s32.totalorder %s104, %s105
      %p114 = scmp.eq.s32.totalorder %s21, 0
      %p115 = por %p113, %p114
      %p116 = scmp.ne.s32.totalorder %s104, %s105
      %p117 = scmp.eq.s32.totalorder %s22, 1
      %p118 = por %p116, %p117
      %p120 = scmp.ne.s32.totalorder %s105, %s119
      %p121 = scmp.eq.s32.totalorder %s22, 0
      %p122 = por %p120, %p121
      %s124 = sadd.s32 %s123, 1
      %p127 = scmp.eq.s32.totalorder %s16, 1
      %p128 = scmp.ne.s32.totalorder %s123, %s125
      %p129 = scmp.eq.s32.totalorder %s16, 0
      %p130 = por %p128, %p129
      %p131 = scmp.ne.s32.totalorder %s123, %s125
      %p132 = scmp.eq.s32.totalorder %s21, 1
      %p133 = por %p131, %p132
      %p134 = scmp.ne.s32.totalorder %s125, %s126
      %p135 = scmp.eq.s32.totalorder %s21, 0
      %p136 = por %p134, %p135
      %p137 = scmp.ne.s32.totalorder %s125, %s126
      %p138 = scmp.eq.s32.totalorder %s22, 1
      %p139 = por %p137, %p138
      %p141 = scmp.ne.s32.totalorder %s126, %s140
      %p142 = scmp.eq.s32.totalorder %s22, 0
      %p143 = por %p141, %p142
      %s145 = sadd.s32 %s144, 1
      %p148 = scmp.eq.s32.totalorder %s16, 1
      %p149 = scmp.ne.s32.totalorder %s144, %s146
      %p150 = scmp.eq.s32.totalorder %s16, 0
      %p151 = por %p149, %p150
      %p152 = scmp.ne.s32.totalorder %s144, %s146
      %p153 = scmp.eq.s32.totalorder %s21, 1
      %p154 = por %p152, %p153
      %p155 = scmp.ne.s32.totalorder %s146, %s147
      %p156 = scmp.eq.s32.totalorder %s21, 0
      %p157 = por %p155, %p156
      %p158 = scmp.ne.s32.totalorder %s146, %s147
      %p159 = scmp.eq.s32.totalorder %s22, 1
      %p160 = por %p158, %p159
      %p162 = scmp.ne.s32.totalorder %s147, %s161
      %p163 = scmp.eq.s32.totalorder %s22, 0
      %p164 = por %p162, %p163
      %s166 = sadd.s32 %s165, 1
      %p169 = scmp.eq.s32.totalorder %s16, 1
      %p170 = scmp.ne.s32.totalorder %s165, %s167
      %p171 = scmp.eq.s32.totalorder %s16, 0
      %p172 = por %p170, %p171
      %p173 = scmp.ne.s32.totalorder %s165, %s167
      %p174 = scmp.eq.s32.totalorder %s21, 1
      %p175 = por %p173, %p174
      %p176 = scmp.ne.s32.totalorder %s167, %s168
      %p177 = scmp.eq.s32.totalorder %s21, 0
      %p178 = por %p176, %p177
      %p179 = scmp.ne.s32.totalorder %s167, %s168
      %p180 = scmp.eq.s32.totalorder %s22, 1
      %p181 = por %p179, %p180
      %p183 = scmp.ne.s32.totalorder %s168, %s182
      %p184 = scmp.eq.s32.totalorder %s22, 0
      %p185 = por %p183, %p184
      %s186 = ssub.s32 %s16, %s23
      %p187 = scmp.eq.s32.totalorder %s186, 0
      %s189 = sadd.s32 %s188, 1
      %s190 = scalar_select %p187, %s188, %s189
      %p193 = pneg %p187
      %p194 = scmp.eq.s32.totalorder %s16, 1
      %p195 = por %p193, %p194
      %p196 = scmp.ne.s32.totalorder %s188, %s191
      %p197 = scmp.eq.s32.totalorder %s16, 0
      %p198 = por %p196, %p197
      %p199 = scmp.ne.s32.totalorder %s188, %s191
      %p200 = scmp.eq.s32.totalorder %s21, 1
      %p201 = por %p199, %p200
      %p202 = scmp.ne.s32.totalorder %s191, %s192
      %p203 = scmp.eq.s32.totalorder %s21, 0
      %p204 = por %p202, %p203
      %p205 = scmp.ne.s32.totalorder %s191, %s192
      %p206 = scmp.eq.s32.totalorder %s22, 1
      %p207 = por %p205, %p206
      %p209 = scmp.ne.s32.totalorder %s192, %s208
      %p210 = scmp.eq.s32.totalorder %s22, 0
      %p211 = por %p209, %p210
      %p212 = scmp.le.s32.totalorder 1, %s16
      %p213 = scmp.lt.s32.totalorder %s16, 3
      %p214 = pnand %p212, %p213
      %p215 = pneg %p214
      // Predicated region
      $region9: #{tpu_custom_call.1} parent=5 // pred_check
        _
      $region10: #{tpu_custom_call.1} parent=5 // pred_check_branch
        %217 = sbr.rel (%p214) target = $region12
      $region11: #{tpu_custom_call.1} parent=5 // pred_region
        %s218 = ssub.s32 %s16, 1
        // Predicated region
        $region13: #{tpu_custom_call.1} parent=11 // pred_check
          %p219 = pneg %p115
        $region14: #{tpu_custom_call.1} parent=11 // pred_check_branch
          %221 = sbr.rel (%p219) target = $region16
        $region15: #{tpu_custom_call.1} parent=11 // pred_region
          _
        $region16: #{tpu_custom_call.1} parent=11 // pred_fallthru
          _
        // Predicated region
        $region17: #{tpu_custom_call.1} parent=11 // pred_check
          %p222 = pneg %p136
        $region18: #{tpu_custom_call.1} parent=11 // pred_check_branch
          %224 = sbr.rel (%p222) target = $region20
        $region19: #{tpu_custom_call.1} parent=11 // pred_region
          _
        $region20: #{tpu_custom_call.1} parent=11 // pred_fallthru
          _
        // Predicated region
        $region21: #{tpu_custom_call.1} parent=11 // pred_check
          %p225 = pneg %p157
        $region22: #{tpu_custom_call.1} parent=11 // pred_check_branch
          %227 = sbr.rel (%p225) target = $region24
        $region23: #{tpu_custom_call.1} parent=11 // pred_region
          _
        $region24: #{tpu_custom_call.1} parent=11 // pred_fallthru
          _
        // Predicated region
        $region25: #{tpu_custom_call.1} parent=11 // pred_check
          %p228 = pneg %p178
        $region26: #{tpu_custom_call.1} parent=11 // pred_check_branch
          %230 = sbr.rel (%p228) target = $region28
        $region27: #{tpu_custom_call.1} parent=11 // pred_region
          _
        $region28: #{tpu_custom_call.1} parent=11 // pred_fallthru
          _
      $region12: #{tpu_custom_call.1} parent=5 // pred_fallthru
        _
      %p231 = scmp.lt.s32.totalorder %s16, 2
      // Predicated region
      $region29: #{tpu_custom_call.1} parent=5 // pred_check
        %p232 = pneg %p231
      $region30: #{tpu_custom_call.1} parent=5 // pred_check_branch
        %234 = sbr.rel (%p232) target = $region32
      $region31: #{tpu_custom_call.1} parent=5 // pred_region
        // Predicated region
        $region33: #{tpu_custom_call.1} parent=31 // pred_check
          %p235 = pneg %p36
        $region34: #{tpu_custom_call.1} parent=31 // pred_check_branch
          %237 = sbr.rel (%p235) target = $region36
        $region35: #{tpu_custom_call.1} parent=31 // pred_region
          %p238 = scmp.lt.s32.totalorder %s16, 1
          %s239 = scalar_select %p238, %s16, 1
          %s240 = smul.addr %s239, 4
          %s241 = scalar_lea.vmem %s0, %s240
        $region36: #{tpu_custom_call.1} parent=31 // pred_fallthru
          _
        // Predicated region
        $region37: #{tpu_custom_call.1} parent=31 // pred_check
          %p242 = pneg %p62
        $region38: #{tpu_custom_call.1} parent=31 // pred_check_branch
          %244 = sbr.rel (%p242) target = $region40
        $region39: #{tpu_custom_call.1} parent=31 // pred_region
          %p245 = scmp.lt.s32.totalorder %s16, 1
          %s246 = scalar_select %p245, %s16, 1
          %s247 = smul.addr %s246, 4
          %s248 = scalar_lea.vmem %s1, %s247
        $region40: #{tpu_custom_call.1} parent=31 // pred_fallthru
          _
        // Predicated region
        $region41: #{tpu_custom_call.1} parent=31 // pred_check
          %p249 = pneg %p88
        $region42: #{tpu_custom_call.1} parent=31 // pred_check_branch
          %251 = sbr.rel (%p249) target = $region44
        $region43: #{tpu_custom_call.1} parent=31 // pred_region
          %p252 = scmp.lt.s32.totalorder %s16, 1
          %s253 = scalar_select %p252, %s16, 1
          %s254 = scalar_lea.vmem %s2, %s253
        $region44: #{tpu_custom_call.1} parent=31 // pred_fallthru
          _
      $region32: #{tpu_custom_call.1} parent=5 // pred_fallthru
        _
      %p255 = scmp.le.s32.totalorder 1, %s16
      %p256 = scmp.lt.s32.totalorder %s16, 3
      %p257 = pnand %p255, %p256
      %p258 = pneg %p257
      // Predicated region
      $region45: #{tpu_custom_call.1} parent=5 // pred_check
        _
      $region46: #{tpu_custom_call.1} parent=5 // pred_check_branch
        %260 = sbr.rel (%p257) target = $region48
      $region47: #{tpu_custom_call.1} parent=5 // pred_region
        %s261 = ssub.s32 %s16, 1
        %p262 = scmp.lt.s32.totalorder %s21, 1
        %s263 = scalar_select %p262, %s21, 1
        %s264 = smul.addr %s263, 4
        %s265 = scalar_lea.vmem %s0, %s264
        %p266 = pneg %p42
        %p267 = pneg %p39
        %p268 = scmp.lt.s32.totalorder %s21, 1
        %s269 = scalar_select %p268, %s21, 1
        %s270 = smul.addr %s269, 4
        %s271 = scalar_lea.vmem %s1, %s270
        %p272 = pneg %p68
        %p273 = pneg %p65
        %p274 = scmp.lt.s32.totalorder %s21, 1
        %s275 = scalar_select %p274, %s21, 1
        %s276 = scalar_lea.vmem %s2, %s275
        %p277 = pneg %p94
        %p278 = pneg %p91
        %p279 = pneg %p115
        %p280 = pneg %p112
        %p281 = pneg %p136
        %p282 = pneg %p133
        %p283 = pneg %p157
        %p284 = pneg %p154
        %p285 = pneg %p178
        %p286 = pneg %p175
        %p287 = pneg %p204
        %p288 = pneg %p201
        %s289 = sand.u32 %s191, 1
        %s290 = scalar_lea.sflag [#allocation3], %s289
        %s291 = sand.u32 %s191, 1
        %s292 = scalar_lea.vmem [#allocation2], %s291
        %p293 = scmp.lt.s32.totalorder %s21, 1
        %s294 = scalar_select %p293, %s21, 1
        %s295 = smul.addr %s294, 4
        %s296 = scalar_lea.vmem %s0, %s295
        %p297 = scmp.lt.s32.totalorder %s21, 1
        %s298 = scalar_select %p297, %s21, 1
        %s299 = smul.addr %s298, 4
        %s300 = scalar_lea.vmem %s1, %s299
        %p301 = scmp.lt.s32.totalorder %s21, 1
        %s302 = scalar_select %p301, %s21, 1
        %s303 = scalar_lea.vmem %s2, %s302
        %v305 = vld [vmem:[%s296] sm:$0xf]
        %v306 = vld [vmem:[%s300] sm:$0xf]
        %v307 = vld [vmem:[%s303] sm:$0x1]
        %v308 = vld [vmem:[%s3] sm:$0xf]
        %v309 = vld [vmem:[%s3 + $0x4] sm:$0xf]
        %v310 = vld [vmem:[%s3 + $0x8] sm:$0xf]
        %v311 = vld [vmem:[%s3 + $0xc] sm:$0xf]
        %v312 = vld [vmem:[%s3 + $0x10] sm:$0xf]
        %v313 = vld [vmem:[%s3 + $0x14] sm:$0xf]
        %v314 = vld [vmem:[%s3 + $0x18] sm:$0xf]
        %v315 = vld [vmem:[%s3 + $0x1c] sm:$0xf]
        %v316 = vld [vmem:[%s3 + $0x20] sm:$0xf]
        %v317 = vld [vmem:[%s3 + $0x24] sm:$0xf]
        %v318 = vld [vmem:[%s3 + $0x28] sm:$0xf]
        %v319 = vld [vmem:[%s3 + $0x2c] sm:$0xf]
        %v320 = vld [vmem:[%s3 + $0x30] sm:$0xf]
        %v321 = vld [vmem:[%s3 + $0x34] sm:$0xf]
        %v322 = vld [vmem:[%s3 + $0x38] sm:$0xf]
        %v323 = vld [vmem:[%s3 + $0x3c] sm:$0xf]
        %v324 = vld [vmem:[%s4] sm:$0x1]
        %v325 = vld [vmem:[%s4 + $0x1] sm:$0x1]
        %v326 = vld [vmem:[%s4 + $0x2] sm:$0x1]
        %v327 = vld [vmem:[%s4 + $0x3] sm:$0x1]
        %v328 = vld [vmem:[%s5] sm:$0xf]
        %v329 = vld [vmem:[%s5 + $0x4] sm:$0xf]
        %v330 = vld [vmem:[%s5 + $0x8] sm:$0xf]
        %v331 = vld [vmem:[%s5 + $0xc] sm:$0xf]
        %v332 = vld [vmem:[%s5 + $0x10] sm:$0xf]
        %v333 = vld [vmem:[%s5 + $0x14] sm:$0xf]
        %v334 = vld [vmem:[%s5 + $0x18] sm:$0xf]
        %v335 = vld [vmem:[%s5 + $0x1c] sm:$0xf]
        %v336 = vld [vmem:[%s5 + $0x20] sm:$0xf]
        %v337 = vld [vmem:[%s5 + $0x24] sm:$0xf]
        %v338 = vld [vmem:[%s5 + $0x28] sm:$0xf]
        %v339 = vld [vmem:[%s5 + $0x2c] sm:$0xf]
        %v340 = vld [vmem:[%s5 + $0x30] sm:$0xf]
        %v341 = vld [vmem:[%s5 + $0x34] sm:$0xf]
        %v342 = vld [vmem:[%s5 + $0x38] sm:$0xf]
        %v343 = vld [vmem:[%s5 + $0x3c] sm:$0xf]
        %v344 = vld [vmem:[%s6] sm:$0x1]
        %v345 = vld [vmem:[%s6 + $0x1] sm:$0x1]
        %v346 = vld [vmem:[%s6 + $0x2] sm:$0x1]
        %v347 = vld [vmem:[%s6 + $0x3] sm:$0x1]
        %v349 = vlaneseq
        %v350 = vshrl.u32 %v349, 7
        %v351 = vsub.s32 0, %v350
        %v352 = vrot.slane %v324, %v351
        %v358 = vunpack.c.l.b16 %v308
        %v359 = vunpack.c.l.b16 %v309
        %v360 = vunpack.c.l.b16 %v310
        %v361 = vunpack.c.l.b16 %v311
        %v362 = vpack.c.b16 %v359, %v358
        %v363 = vpack.c.b16 %v361, %v360
        %vm366 = vcmask 261120
        %v368 = vsel %vm366, %v305, 0
        %370 = vmatprep.subr.bf16.mxu0 0
        %371 = vmatpush1.bf16.msra.mxu0 0
        %372 = vmatprep.subr.bf16.mxu0 0
        %373 = vmatpush1.bf16.msra.mxu0 0
        %374 = vmatprep.subr.bf16.mxu0 0
        %375 = vmatpush1.bf16.msra.mxu0 0
        %376 = vmatprep.subr.bf16.mxu0 0
        %377 = vmatpush1.bf16.msra.mxu0 0
        %378 = vmatprep.subr.bf16.mxu0 0
        %379 = vmatpush1.bf16.msra.mxu0 0
        %380 = vmatprep.subr.bf16.mxu0 0
        %381 = vmatpush1.bf16.msra.mxu0 0
        %382 = vmatprep.subr.bf16.mxu0 0
        %383 = vmatpush1.bf16.msra.mxu0 %v363
        %384 = vmatprep.subr.bf16.mxu0 0
        %385 = vmatpush1.bf16.msra.mxu0 %v362
        %386 = vmatprep.subr.bf16.mxu0 0
        %387 = vmatpush2.bf16.msra.mxu0 0
        %388 = vmatprep.subr.bf16.mxu0 0
        %389 = vmatpush2.bf16.msra.mxu0 0
        %390 = vmatprep.subr.bf16.mxu0 0
        %391 = vmatpush2.bf16.msra.mxu0 0
        %392 = vmatprep.subr.bf16.mxu0 0
        %393 = vmatpush2.bf16.msra.mxu0 0
        %394 = vmatprep.subr.bf16.mxu0 0
        %395 = vmatpush2.bf16.msra.mxu0 0
        %396 = vmatprep.subr.bf16.mxu0 0
        %397 = vmatpush2.bf16.msra.mxu0 0
        %398 = vmatprep.subr.bf16.mxu0 0
        %399 = vmatpush2.bf16.msra.mxu0 0
        %400 = vmatprep.subr.bf16.mxu0 0
        %401 = vmatpush2.bf16.msra.mxu0 0
        %402 = vmatprep.mubr.bf16.mxu0 0
        %403 = vmatmul.mubr.bf16.gmra.mxu0 %v368
        %v404 = vpop.f32.mrf.mxu0
        %v405 = vadd.f32 %v352, %v404
        %v406 = vpop.f32.mrf.mxu0
        %v407 = vpop.f32.mrf.mxu0
        %v408 = vpop.f32.mrf.mxu0
        %409 = vdwg.mxu0
        %v411 = vlaneseq
        %v412 = vshrl.u32 %v411, 7
        %v413 = vsub.s32 0, %v412
        %v414 = vrot.slane %v344, %v413
        %v420 = vunpack.c.l.b16 %v328
        %v421 = vunpack.c.l.b16 %v329
        %v422 = vunpack.c.l.b16 %v330
        %v423 = vunpack.c.l.b16 %v331
        %v424 = vpack.c.b16 %v421, %v420
        %v425 = vpack.c.b16 %v423, %v422
        %v429 = vsel %vm366, %v306, 0
        %431 = vmatprep.subr.bf16.mxu0 0
        %432 = vmatpush1.bf16.msra.mxu0 0
        %433 = vmatprep.subr.bf16.mxu0 0
        %434 = vmatpush1.bf16.msra.mxu0 0
        %435 = vmatprep.subr.bf16.mxu0 0
        %436 = vmatpush1.bf16.msra.mxu0 0
        %437 = vmatprep.subr.bf16.mxu0 0
        %438 = vmatpush1.bf16.msra.mxu0 0
        %439 = vmatprep.subr.bf16.mxu0 0
        %440 = vmatpush1.bf16.msra.mxu0 0
        %441 = vmatprep.subr.bf16.mxu0 0
        %442 = vmatpush1.bf16.msra.mxu0 0
        %443 = vmatprep.subr.bf16.mxu0 0
        %444 = vmatpush1.bf16.msra.mxu0 %v425
        %445 = vmatprep.subr.bf16.mxu0 0
        %446 = vmatpush1.bf16.msra.mxu0 %v424
        %447 = vmatprep.subr.bf16.mxu0 0
        %448 = vmatpush2.bf16.msra.mxu0 0
        %449 = vmatprep.subr.bf16.mxu0 0
        %450 = vmatpush2.bf16.msra.mxu0 0
        %451 = vmatprep.subr.bf16.mxu0 0
        %452 = vmatpush2.bf16.msra.mxu0 0
        %453 = vmatprep.subr.bf16.mxu0 0
        %454 = vmatpush2.bf16.msra.mxu0 0
        %455 = vmatprep.subr.bf16.mxu0 0
        %456 = vmatpush2.bf16.msra.mxu0 0
        %457 = vmatprep.subr.bf16.mxu0 0
        %458 = vmatpush2.bf16.msra.mxu0 0
        %459 = vmatprep.subr.bf16.mxu0 0
        %460 = vmatpush2.bf16.msra.mxu0 0
        %461 = vmatprep.subr.bf16.mxu0 0
        %462 = vmatpush2.bf16.msra.mxu0 0
        %463 = vmatprep.mubr.bf16.mxu0 0
        %464 = vmatmul.mubr.bf16.gmra.mxu0 %v429
        %v465 = vpop.f32.mrf.mxu0
        %v466 = vadd.f32 %v414, %v465
        %v467 = vpop.f32.mrf.mxu0
        %v468 = vpop.f32.mrf.mxu0
        %v469 = vpop.f32.mrf.mxu0
        %470 = vdwg.mxu0
        %v471 = vpack.c.bf16 %v466, %v466
        %v472 = vpack.c.bf16 %v405, %v405
        %vm473 = vcmask 64512
        %v475 = vsel %vm473, %v471, 0
        %v478 = vsel %vm473, %v472, 0
        %480 = vmatprep.subr.bf16.mxu0 0
        %481 = vmatpush1.bf16.xpose.msra.mxu0 0
        %482 = vmatprep.subr.bf16.mxu0 0
        %483 = vmatpush1.bf16.xpose.msra.mxu0 0
        %484 = vmatprep.subr.bf16.mxu0 0
        %485 = vmatpush1.bf16.xpose.msra.mxu0 0
        %486 = vmatprep.subr.bf16.mxu0 0
        %487 = vmatpush1.bf16.xpose.msra.mxu0 0
        %488 = vmatprep.subr.bf16.mxu0 0
        %489 = vmatpush1.bf16.xpose.msra.mxu0 0
        %490 = vmatprep.subr.bf16.mxu0 0
        %491 = vmatpush1.bf16.xpose.msra.mxu0 0
        %492 = vmatprep.subr.bf16.mxu0 0
        %493 = vmatpush1.bf16.xpose.msra.mxu0 0
        %494 = vmatprep.subr.bf16.mxu0 0
        %495 = vmatpush1.bf16.xpose.msra.mxu0 %v478
        %496 = vmatprep.subr.bf16.mxu0 0
        %497 = vmatpush2.bf16.xpose.msra.mxu0 0
        %498 = vmatprep.subr.bf16.mxu0 0
        %499 = vmatpush2.bf16.xpose.msra.mxu0 0
        %500 = vmatprep.subr.bf16.mxu0 0
        %501 = vmatpush2.bf16.xpose.msra.mxu0 0
        %502 = vmatprep.subr.bf16.mxu0 0
        %503 = vmatpush2.bf16.xpose.msra.mxu0 0
        %504 = vmatprep.subr.bf16.mxu0 0
        %505 = vmatpush2.bf16.xpose.msra.mxu0 0
        %506 = vmatprep.subr.bf16.mxu0 0
        %507 = vmatpush2.bf16.xpose.msra.mxu0 0
        %508 = vmatprep.subr.bf16.mxu0 0
        %509 = vmatpush2.bf16.xpose.msra.mxu0 0
        %510 = vmatprep.subr.bf16.mxu0 0
        %511 = vmatpush2.bf16.xpose.msra.mxu0 0
        %512 = vmatprep.mubr.bf16.mxu0 0
        %513 = vmatmul.mubr.bf16.gmra.mxu0 %v475
        %v514 = vpop.f32.mrf.mxu0
        %v515 = vadd.f32 0.0, %v514
        %v516 = vpop.f32.mrf.mxu0
        %v517 = vpop.f32.mrf.mxu0
        %v518 = vpop.f32.mrf.mxu0
        %519 = vdwg.mxu0
        %v520 = vsel %vm473, %v515, -inf
        %v521 = vrot.slane %v520, 4
        %v522 = vmax.f32 %v520, %v521
        %v523 = vrot.slane %v522, 2
        %v524 = vmax.f32 %v522, %v523
        %v525 = vrot.slane %v524, 1
        %v526 = vmax.f32 %v524, %v525
        %v527 = vsub.f32 %v515, %v526
        %v528 = vmul.f32 %v527, 1.442695
        %v529 = vpow.pop %v528
        %v530 = vsel %vm473, %v529, 0.0
        %v531 = vrot.slane %v530, 4
        %v532 = vadd.f32 %v530, %v531
        %v533 = vrot.slane %v532, 2
        %v534 = vadd.f32 %v532, %v533
        %v535 = vrot.slane %v534, 1
        %v536 = vadd.f32 %v534, %v535
        %v538 = vsel %vm473, %v307, 0
        %540 = vmatprep.subr.mxu0 0.0
        %541 = vmatpush1.msra.mxu0 0.0
        %542 = vmatprep.subr.mxu0 0.0
        %543 = vmatpush1.msra.mxu0 0.0
        %544 = vmatprep.subr.mxu0 0.0
        %545 = vmatpush1.msra.mxu0 0.0
        %546 = vmatprep.subr.mxu0 0.0
        %547 = vmatpush1.msra.mxu0 0.0
        %548 = vmatprep.subr.mxu0 0.0
        %549 = vmatpush1.msra.mxu0 0.0
        %550 = vmatprep.subr.mxu0 0.0
        %551 = vmatpush1.msra.mxu0 0.0
        %552 = vmatprep.subr.mxu0 0.0
        %553 = vmatpush1.msra.mxu0 0.0
        %554 = vmatprep.subr.mxu0 0.0
        %555 = vmatpush1.msra.mxu0 0.0
        %556 = vmatprep.subr.mxu0 0.0
        %557 = vmatpush1.msra.mxu0 0.0
        %558 = vmatprep.subr.mxu0 0.0
        %559 = vmatpush1.msra.mxu0 0.0
        %560 = vmatprep.subr.mxu0 0.0
        %561 = vmatpush1.msra.mxu0 0.0
        %562 = vmatprep.subr.mxu0 0.0
        %563 = vmatpush1.msra.mxu0 0.0
        %564 = vmatprep.subr.mxu0 0.0
        %565 = vmatpush1.msra.mxu0 0.0
        %566 = vmatprep.subr.mxu0 0.0
        %567 = vmatpush1.msra.mxu0 0.0
        %568 = vmatprep.subr.mxu0 0.0
        %569 = vmatpush1.msra.mxu0 0.0
        %570 = vmatprep.subr.mxu0 0.0
        %571 = vmatpush1.msra.mxu0 %v529
        %572 = vmatprep.subr.mxu0 0.0
        %573 = vmatpush2.msra.mxu0 0.0
        %574 = vmatprep.subr.mxu0 0.0
        %575 = vmatpush2.msra.mxu0 0.0
        %576 = vmatprep.subr.mxu0 0.0
        %577 = vmatpush2.msra.mxu0 0.0
        %578 = vmatprep.subr.mxu0 0.0
        %579 = vmatpush2.msra.mxu0 0.0
        %580 = vmatprep.subr.mxu0 0.0
        %581 = vmatpush2.msra.mxu0 0.0
        %582 = vmatprep.subr.mxu0 0.0
        %583 = vmatpush2.msra.mxu0 0.0
        %584 = vmatprep.subr.mxu0 0.0
        %585 = vmatpush2.msra.mxu0 0.0
        %586 = vmatprep.subr.mxu0 0.0
        %587 = vmatpush2.msra.mxu0 0.0
        %588 = vmatprep.subr.mxu0 0.0
        %589 = vmatpush2.msra.mxu0 0.0
        %590 = vmatprep.subr.mxu0 0.0
        %591 = vmatpush2.msra.mxu0 0.0
        %592 = vmatprep.subr.mxu0 0.0
        %593 = vmatpush2.msra.mxu0 0.0
        %594 = vmatprep.subr.mxu0 0.0
        %595 = vmatpush2.msra.mxu0 0.0
        %596 = vmatprep.subr.mxu0 0.0
        %597 = vmatpush2.msra.mxu0 0.0
        %598 = vmatprep.subr.mxu0 0.0
        %599 = vmatpush2.msra.mxu0 0.0
        %600 = vmatprep.subr.mxu0 0.0
        %601 = vmatpush2.msra.mxu0 0.0
        %602 = vmatprep.subr.mxu0 0.0
        %603 = vmatpush2.msra.mxu0 0.0
        %604 = vmatprep.mubr.f32.mxu0 0.0
        %605 = vmatmul.mubr.f32.gmra.mxu0 %v538
        %v606 = vpop.f32.mrf.mxu0
        %v607 = vadd.f32 0.0, %v606
        %v608 = vpop.f32.mrf.mxu0
        %609 = vdwg.mxu0
        %v610 = vrcp.pop %v536
        %v611 = vmul.f32 %v607, %v610
        %v612 = vadd.f32 %v611, 0.0
        %v614 = vlaneseq
        %v615 = vshrl.u32 %v614, 7
        %v616 = vsub.s32 0, %v615
        %v617 = vrot.slane %v325, %v616
        %v623 = vunpack.c.l.b16 %v312
        %v624 = vunpack.c.l.b16 %v313
        %v625 = vunpack.c.l.b16 %v314
        %v626 = vunpack.c.l.b16 %v315
        %v627 = vpack.c.b16 %v624, %v623
        %v628 = vpack.c.b16 %v626, %v625
        %631 = vmatprep.subr.bf16.mxu0 0
        %632 = vmatpush1.bf16.msra.mxu0 0
        %633 = vmatprep.subr.bf16.mxu0 0
        %634 = vmatpush1.bf16.msra.mxu0 0
        %635 = vmatprep.subr.bf16.mxu0 0
        %636 = vmatpush1.bf16.msra.mxu0 0
        %637 = vmatprep.subr.bf16.mxu0 0
        %638 = vmatpush1.bf16.msra.mxu0 0
        %639 = vmatprep.subr.bf16.mxu0 0
        %640 = vmatpush1.bf16.msra.mxu0 0
        %641 = vmatprep.subr.bf16.mxu0 0
        %642 = vmatpush1.bf16.msra.mxu0 0
        %643 = vmatprep.subr.bf16.mxu0 0
        %644 = vmatpush1.bf16.msra.mxu0 %v628
        %645 = vmatprep.subr.bf16.mxu0 0
        %646 = vmatpush1.bf16.msra.mxu0 %v627
        %647 = vmatprep.subr.bf16.mxu0 0
        %648 = vmatpush2.bf16.msra.mxu0 0
        %649 = vmatprep.subr.bf16.mxu0 0
        %650 = vmatpush2.bf16.msra.mxu0 0
        %651 = vmatprep.subr.bf16.mxu0 0
        %652 = vmatpush2.bf16.msra.mxu0 0
        %653 = vmatprep.subr.bf16.mxu0 0
        %654 = vmatpush2.bf16.msra.mxu0 0
        %655 = vmatprep.subr.bf16.mxu0 0
        %656 = vmatpush2.bf16.msra.mxu0 0
        %657 = vmatprep.subr.bf16.mxu0 0
        %658 = vmatpush2.bf16.msra.mxu0 0
        %659 = vmatprep.subr.bf16.mxu0 0
        %660 = vmatpush2.bf16.msra.mxu0 0
        %661 = vmatprep.subr.bf16.mxu0 0
        %662 = vmatpush2.bf16.msra.mxu0 0
        %663 = vmatprep.mubr.bf16.mxu0 0
        %664 = vmatmul.mubr.bf16.gmra.mxu0 %v368
        %v665 = vpop.f32.mrf.mxu0
        %v666 = vadd.f32 %v617, %v665
        %v667 = vpop.f32.mrf.mxu0
        %v668 = vpop.f32.mrf.mxu0
        %v669 = vpop.f32.mrf.mxu0
        %670 = vdwg.mxu0
        %v672 = vlaneseq
        %v673 = vshrl.u32 %v672, 7
        %v674 = vsub.s32 0, %v673
        %v675 = vrot.slane %v345, %v674
        %v681 = vunpack.c.l.b16 %v332
        %v682 = vunpack.c.l.b16 %v333
        %v683 = vunpack.c.l.b16 %v334
        %v684 = vunpack.c.l.b16 %v335
        %v685 = vpack.c.b16 %v682, %v681
        %v686 = vpack.c.b16 %v684, %v683
        %689 = vmatprep.subr.bf16.mxu0 0
        %690 = vmatpush1.bf16.msra.mxu0 0
        %691 = vmatprep.subr.bf16.mxu0 0
        %692 = vmatpush1.bf16.msra.mxu0 0
        %693 = vmatprep.subr.bf16.mxu0 0
        %694 = vmatpush1.bf16.msra.mxu0 0
        %695 = vmatprep.subr.bf16.mxu0 0
        %696 = vmatpush1.bf16.msra.mxu0 0
        %697 = vmatprep.subr.bf16.mxu0 0
        %698 = vmatpush1.bf16.msra.mxu0 0
        %699 = vmatprep.subr.bf16.mxu0 0
        %700 = vmatpush1.bf16.msra.mxu0 0
        %701 = vmatprep.subr.bf16.mxu0 0
        %702 = vmatpush1.bf16.msra.mxu0 %v686
        %703 = vmatprep.subr.bf16.mxu0 0
        %704 = vmatpush1.bf16.msra.mxu0 %v685
        %705 = vmatprep.subr.bf16.mxu0 0
        %706 = vmatpush2.bf16.msra.mxu0 0
        %707 = vmatprep.subr.bf16.mxu0 0
        %708 = vmatpush2.bf16.msra.mxu0 0
        %709 = vmatprep.subr.bf16.mxu0 0
        %710 = vmatpush2.bf16.msra.mxu0 0
        %711 = vmatprep.subr.bf16.mxu0 0
        %712 = vmatpush2.bf16.msra.mxu0 0
        %713 = vmatprep.subr.bf16.mxu0 0
        %714 = vmatpush2.bf16.msra.mxu0 0
        %715 = vmatprep.subr.bf16.mxu0 0
        %716 = vmatpush2.bf16.msra.mxu0 0
        %717 = vmatprep.subr.bf16.mxu0 0
        %718 = vmatpush2.bf16.msra.mxu0 0
        %719 = vmatprep.subr.bf16.mxu0 0
        %720 = vmatpush2.bf16.msra.mxu0 0
        %721 = vmatprep.mubr.bf16.mxu0 0
        %722 = vmatmul.mubr.bf16.gmra.mxu0 %v429
        %v723 = vpop.f32.mrf.mxu0
        %v724 = vadd.f32 %v675, %v723
        %v725 = vpop.f32.mrf.mxu0
        %v726 = vpop.f32.mrf.mxu0
        %v727 = vpop.f32.mrf.mxu0
        %728 = vdwg.mxu0
        %v729 = vpack.c.bf16 %v724, %v724
        %v730 = vpack.c.bf16 %v666, %v666
        %v732 = vsel %vm473, %v729, 0
        %v735 = vsel %vm473, %v730, 0
        %737 = vmatprep.subr.bf16.mxu0 0
        %738 = vmatpush1.bf16.xpose.msra.mxu0 0
        %739 = vmatprep.subr.bf16.mxu0 0
        %740 = vmatpush1.bf16.xpose.msra.mxu0 0
        %741 = vmatprep.subr.bf16.mxu0 0
        %742 = vmatpush1.bf16.xpose.msra.mxu0 0
        %743 = vmatprep.subr.bf16.mxu0 0
        %744 = vmatpush1.bf16.xpose.msra.mxu0 0
        %745 = vmatprep.subr.bf16.mxu0 0
        %746 = vmatpush1.bf16.xpose.msra.mxu0 0
        %747 = vmatprep.subr.bf16.mxu0 0
        %748 = vmatpush1.bf16.xpose.msra.mxu0 0
        %749 = vmatprep.subr.bf16.mxu0 0
        %750 = vmatpush1.bf16.xpose.msra.mxu0 0
        %751 = vmatprep.subr.bf16.mxu0 0
        %752 = vmatpush1.bf16.xpose.msra.mxu0 %v735
        %753 = vmatprep.subr.bf16.mxu0 0
        %754 = vmatpush2.bf16.xpose.msra.mxu0 0
        %755 = vmatprep.subr.bf16.mxu0 0
        %756 = vmatpush2.bf16.xpose.msra.mxu0 0
        %757 = vmatprep.subr.bf16.mxu0 0
        %758 = vmatpush2.bf16.xpose.msra.mxu0 0
        %759 = vmatprep.subr.bf16.mxu0 0
        %760 = vmatpush2.bf16.xpose.msra.mxu0 0
        %761 = vmatprep.subr.bf16.mxu0 0
        %762 = vmatpush2.bf16.xpose.msra.mxu0 0
        %763 = vmatprep.subr.bf16.mxu0 0
        %764 = vmatpush2.bf16.xpose.msra.mxu0 0
        %765 = vmatprep.subr.bf16.mxu0 0
        %766 = vmatpush2.bf16.xpose.msra.mxu0 0
        %767 = vmatprep.subr.bf16.mxu0 0
        %768 = vmatpush2.bf16.xpose.msra.mxu0 0
        %769 = vmatprep.mubr.bf16.mxu0 0
        %770 = vmatmul.mubr.bf16.gmra.mxu0 %v732
        %v771 = vpop.f32.mrf.mxu0
        %v772 = vadd.f32 0.0, %v771
        %v773 = vpop.f32.mrf.mxu0
        %v774 = vpop.f32.mrf.mxu0
        %v775 = vpop.f32.mrf.mxu0
        %776 = vdwg.mxu0
        %v777 = vsel %vm473, %v772, -inf
        %v778 = vrot.slane %v777, 4
        %v779 = vmax.f32 %v777, %v778
        %v780 = vrot.slane %v779, 2
        %v781 = vmax.f32 %v779, %v780
        %v782 = vrot.slane %v781, 1
        %v783 = vmax.f32 %v781, %v782
        %v784 = vsub.f32 %v772, %v783
        %v785 = vmul.f32 %v784, 1.442695
        %v786 = vpow.pop %v785
        %v787 = vsel %vm473, %v786, 0.0
        %v788 = vrot.slane %v787, 4
        %v789 = vadd.f32 %v787, %v788
        %v790 = vrot.slane %v789, 2
        %v791 = vadd.f32 %v789, %v790
        %v792 = vrot.slane %v791, 1
        %v793 = vadd.f32 %v791, %v792
        %794 = vmatprep.subr.mxu0 0.0
        %795 = vmatpush1.msra.mxu0 0.0
        %796 = vmatprep.subr.mxu0 0.0
        %797 = vmatpush1.msra.mxu0 0.0
        %798 = vmatprep.subr.mxu0 0.0
        %799 = vmatpush1.msra.mxu0 0.0
        %800 = vmatprep.subr.mxu0 0.0
        %801 = vmatpush1.msra.mxu0 0.0
        %802 = vmatprep.subr.mxu0 0.0
        %803 = vmatpush1.msra.mxu0 0.0
        %804 = vmatprep.subr.mxu0 0.0
        %805 = vmatpush1.msra.mxu0 0.0
        %806 = vmatprep.subr.mxu0 0.0
        %807 = vmatpush1.msra.mxu0 0.0
        %808 = vmatprep.subr.mxu0 0.0
        %809 = vmatpush1.msra.mxu0 0.0
        %810 = vmatprep.subr.mxu0 0.0
        %811 = vmatpush1.msra.mxu0 0.0
        %812 = vmatprep.subr.mxu0 0.0
        %813 = vmatpush1.msra.mxu0 0.0
        %814 = vmatprep.subr.mxu0 0.0
        %815 = vmatpush1.msra.mxu0 0.0
        %816 = vmatprep.subr.mxu0 0.0
        %817 = vmatpush1.msra.mxu0 0.0
        %818 = vmatprep.subr.mxu0 0.0
        %819 = vmatpush1.msra.mxu0 0.0
        %820 = vmatprep.subr.mxu0 0.0
        %821 = vmatpush1.msra.mxu0 0.0
        %822 = vmatprep.subr.mxu0 0.0
        %823 = vmatpush1.msra.mxu0 0.0
        %824 = vmatprep.subr.mxu0 0.0
        %825 = vmatpush1.msra.mxu0 %v786
        %826 = vmatprep.subr.mxu0 0.0
        %827 = vmatpush2.msra.mxu0 0.0
        %828 = vmatprep.subr.mxu0 0.0
        %829 = vmatpush2.msra.mxu0 0.0
        %830 = vmatprep.subr.mxu0 0.0
        %831 = vmatpush2.msra.mxu0 0.0
        %832 = vmatprep.subr.mxu0 0.0
        %833 = vmatpush2.msra.mxu0 0.0
        %834 = vmatprep.subr.mxu0 0.0
        %835 = vmatpush2.msra.mxu0 0.0
        %836 = vmatprep.subr.mxu0 0.0
        %837 = vmatpush2.msra.mxu0 0.0
        %838 = vmatprep.subr.mxu0 0.0
        %839 = vmatpush2.msra.mxu0 0.0
        %840 = vmatprep.subr.mxu0 0.0
        %841 = vmatpush2.msra.mxu0 0.0
        %842 = vmatprep.subr.mxu0 0.0
        %843 = vmatpush2.msra.mxu0 0.0
        %844 = vmatprep.subr.mxu0 0.0
        %845 = vmatpush2.msra.mxu0 0.0
        %846 = vmatprep.subr.mxu0 0.0
        %847 = vmatpush2.msra.mxu0 0.0
        %848 = vmatprep.subr.mxu0 0.0
        %849 = vmatpush2.msra.mxu0 0.0
        %850 = vmatprep.subr.mxu0 0.0
        %851 = vmatpush2.msra.mxu0 0.0
        %852 = vmatprep.subr.mxu0 0.0
        %853 = vmatpush2.msra.mxu0 0.0
        %854 = vmatprep.subr.mxu0 0.0
        %855 = vmatpush2.msra.mxu0 0.0
        %856 = vmatprep.subr.mxu0 0.0
        %857 = vmatpush2.msra.mxu0 0.0
        %858 = vmatprep.mubr.f32.mxu0 0.0
        %859 = vmatmul.mubr.f32.gmra.mxu0 %v538
        %v860 = vpop.f32.mrf.mxu0
        %v861 = vadd.f32 0.0, %v860
        %v862 = vpop.f32.mrf.mxu0
        %863 = vdwg.mxu0
        %v864 = vrcp.pop %v793
        %v865 = vmul.f32 %v861, %v864
        %v866 = vadd.f32 %v612, %v865
        %v868 = vlaneseq
        %v869 = vshrl.u32 %v868, 7
        %v870 = vsub.s32 0, %v869
        %v871 = vrot.slane %v326, %v870
        %v877 = vunpack.c.l.b16 %v316
        %v878 = vunpack.c.l.b16 %v317
        %v879 = vunpack.c.l.b16 %v318
        %v880 = vunpack.c.l.b16 %v319
        %v881 = vpack.c.b16 %v878, %v877
        %v882 = vpack.c.b16 %v880, %v879
        %885 = vmatprep.subr.bf16.mxu0 0
        %886 = vmatpush1.bf16.msra.mxu0 0
        %887 = vmatprep.subr.bf16.mxu0 0
        %888 = vmatpush1.bf16.msra.mxu0 0
        %889 = vmatprep.subr.bf16.mxu0 0
        %890 = vmatpush1.bf16.msra.mxu0 0
        %891 = vmatprep.subr.bf16.mxu0 0
        %892 = vmatpush1.bf16.msra.mxu0 0
        %893 = vmatprep.subr.bf16.mxu0 0
        %894 = vmatpush1.bf16.msra.mxu0 0
        %895 = vmatprep.subr.bf16.mxu0 0
        %896 = vmatpush1.bf16.msra.mxu0 0
        %897 = vmatprep.subr.bf16.mxu0 0
        %898 = vmatpush1.bf16.msra.mxu0 %v882
        %899 = vmatprep.subr.bf16.mxu0 0
        %900 = vmatpush1.bf16.msra.mxu0 %v881
        %901 = vmatprep.subr.bf16.mxu0 0
        %902 = vmatpush2.bf16.msra.mxu0 0
        %903 = vmatprep.subr.bf16.mxu0 0
        %904 = vmatpush2.bf16.msra.mxu0 0
        %905 = vmatprep.subr.bf16.mxu0 0
        %906 = vmatpush2.bf16.msra.mxu0 0
        %907 = vmatprep.subr.bf16.mxu0 0
        %908 = vmatpush2.bf16.msra.mxu0 0
        %909 = vmatprep.subr.bf16.mxu0 0
        %910 = vmatpush2.bf16.msra.mxu0 0
        %911 = vmatprep.subr.bf16.mxu0 0
        %912 = vmatpush2.bf16.msra.mxu0 0
        %913 = vmatprep.subr.bf16.mxu0 0
        %914 = vmatpush2.bf16.msra.mxu0 0
        %915 = vmatprep.subr.bf16.mxu0 0
        %916 = vmatpush2.bf16.msra.mxu0 0
        %917 = vmatprep.mubr.bf16.mxu0 0
        %918 = vmatmul.mubr.bf16.gmra.mxu0 %v368
        %v919 = vpop.f32.mrf.mxu0
        %v920 = vadd.f32 %v871, %v919
        %v921 = vpop.f32.mrf.mxu0
        %v922 = vpop.f32.mrf.mxu0
        %v923 = vpop.f32.mrf.mxu0
        %924 = vdwg.mxu0
        %v926 = vlaneseq
        %v927 = vshrl.u32 %v926, 7
        %v928 = vsub.s32 0, %v927
        %v929 = vrot.slane %v346, %v928
        %v935 = vunpack.c.l.b16 %v336
        %v936 = vunpack.c.l.b16 %v337
        %v937 = vunpack.c.l.b16 %v338
        %v938 = vunpack.c.l.b16 %v339
        %v939 = vpack.c.b16 %v936, %v935
        %v940 = vpack.c.b16 %v938, %v937
        %943 = vmatprep.subr.bf16.mxu0 0
        %944 = vmatpush1.bf16.msra.mxu0 0
        %945 = vmatprep.subr.bf16.mxu0 0
        %946 = vmatpush1.bf16.msra.mxu0 0
        %947 = vmatprep.subr.bf16.mxu0 0
        %948 = vmatpush1.bf16.msra.mxu0 0
        %949 = vmatprep.subr.bf16.mxu0 0
        %950 = vmatpush1.bf16.msra.mxu0 0
        %951 = vmatprep.subr.bf16.mxu0 0
        %952 = vmatpush1.bf16.msra.mxu0 0
        %953 = vmatprep.subr.bf16.mxu0 0
        %954 = vmatpush1.bf16.msra.mxu0 0
        %955 = vmatprep.subr.bf16.mxu0 0
        %956 = vmatpush1.bf16.msra.mxu0 %v940
        %957 = vmatprep.subr.bf16.mxu0 0
        %958 = vmatpush1.bf16.msra.mxu0 %v939
        %959 = vmatprep.subr.bf16.mxu0 0
        %960 = vmatpush2.bf16.msra.mxu0 0
        %961 = vmatprep.subr.bf16.mxu0 0
        %962 = vmatpush2.bf16.msra.mxu0 0
        %963 = vmatprep.subr.bf16.mxu0 0
        %964 = vmatpush2.bf16.msra.mxu0 0
        %965 = vmatprep.subr.bf16.mxu0 0
        %966 = vmatpush2.bf16.msra.mxu0 0
        %967 = vmatprep.subr.bf16.mxu0 0
        %968 = vmatpush2.bf16.msra.mxu0 0
        %969 = vmatprep.subr.bf16.mxu0 0
        %970 = vmatpush2.bf16.msra.mxu0 0
        %971 = vmatprep.subr.bf16.mxu0 0
        %972 = vmatpush2.bf16.msra.mxu0 0
        %973 = vmatprep.subr.bf16.mxu0 0
        %974 = vmatpush2.bf16.msra.mxu0 0
        %975 = vmatprep.mubr.bf16.mxu0 0
        %976 = vmatmul.mubr.bf16.gmra.mxu0 %v429
        %v977 = vpop.f32.mrf.mxu0
        %v978 = vadd.f32 %v929, %v977
        %v979 = vpop.f32.mrf.mxu0
        %v980 = vpop.f32.mrf.mxu0
        %v981 = vpop.f32.mrf.mxu0
        %982 = vdwg.mxu0
        %v983 = vpack.c.bf16 %v978, %v978
        %v984 = vpack.c.bf16 %v920, %v920
        %v986 = vsel %vm473, %v983, 0
        %v989 = vsel %vm473, %v984, 0
        %991 = vmatprep.subr.bf16.mxu0 0
        %992 = vmatpush1.bf16.xpose.msra.mxu0 0
        %993 = vmatprep.subr.bf16.mxu0 0
        %994 = vmatpush1.bf16.xpose.msra.mxu0 0
        %995 = vmatprep.subr.bf16.mxu0 0
        %996 = vmatpush1.bf16.xpose.msra.mxu0 0
        %997 = vmatprep.subr.bf16.mxu0 0
        %998 = vmatpush1.bf16.xpose.msra.mxu0 0
        %999 = vmatprep.subr.bf16.mxu0 0
        %1000 = vmatpush1.bf16.xpose.msra.mxu0 0
        %1001 = vmatprep.subr.bf16.mxu0 0
        %1002 = vmatpush1.bf16.xpose.msra.mxu0 0
        %1003 = vmatprep.subr.bf16.mxu0 0
        %1004 = vmatpush1.bf16.xpose.msra.mxu0 0
        %1005 = vmatprep.subr.bf16.mxu0 0
        %1006 = vmatpush1.bf16.xpose.msra.mxu0 %v989
        %1007 = vmatprep.subr.bf16.mxu0 0
        %1008 = vmatpush2.bf16.xpose.msra.mxu0 0
        %1009 = vmatprep.subr.bf16.mxu0 0
        %1010 = vmatpush2.bf16.xpose.msra.mxu0 0
        %1011 = vmatprep.subr.bf16.mxu0 0
        %1012 = vmatpush2.bf16.xpose.msra.mxu0 0
        %1013 = vmatprep.subr.bf16.mxu0 0
        %1014 = vmatpush2.bf16.xpose.msra.mxu0 0
        %1015 = vmatprep.subr.bf16.mxu0 0
        %1016 = vmatpush2.bf16.xpose.msra.mxu0 0
        %1017 = vmatprep.subr.bf16.mxu0 0
        %1018 = vmatpush2.bf16.xpose.msra.mxu0 0
        %1019 = vmatprep.subr.bf16.mxu0 0
        %1020 = vmatpush2.bf16.xpose.msra.mxu0 0
        %1021 = vmatprep.subr.bf16.mxu0 0
        %1022 = vmatpush2.bf16.xpose.msra.mxu0 0
        %1023 = vmatprep.mubr.bf16.mxu0 0
        %1024 = vmatmul.mubr.bf16.gmra.mxu0 %v986
        %v1025 = vpop.f32.mrf.mxu0
        %v1026 = vadd.f32 0.0, %v1025
        %v1027 = vpop.f32.mrf.mxu0
        %v1028 = vpop.f32.mrf.mxu0
        %v1029 = vpop.f32.mrf.mxu0
        %1030 = vdwg.mxu0
        %v1031 = vsel %vm473, %v1026, -inf
        %v1032 = vrot.slane %v1031, 4
        %v1033 = vmax.f32 %v1031, %v1032
        %v1034 = vrot.slane %v1033, 2
        %v1035 = vmax.f32 %v1033, %v1034
        %v1036 = vrot.slane %v1035, 1
        %v1037 = vmax.f32 %v1035, %v1036
        %v1038 = vsub.f32 %v1026, %v1037
        %v1039 = vmul.f32 %v1038, 1.442695
        %v1040 = vpow.pop %v1039
        %v1041 = vsel %vm473, %v1040, 0.0
        %v1042 = vrot.slane %v1041, 4
        %v1043 = vadd.f32 %v1041, %v1042
        %v1044 = vrot.slane %v1043, 2
        %v1045 = vadd.f32 %v1043, %v1044
        %v1046 = vrot.slane %v1045, 1
        %v1047 = vadd.f32 %v1045, %v1046
        %1048 = vmatprep.subr.mxu0 0.0
        %1049 = vmatpush1.msra.mxu0 0.0
        %1050 = vmatprep.subr.mxu0 0.0
        %1051 = vmatpush1.msra.mxu0 0.0
        %1052 = vmatprep.subr.mxu0 0.0
        %1053 = vmatpush1.msra.mxu0 0.0
        %1054 = vmatprep.subr.mxu0 0.0
        %1055 = vmatpush1.msra.mxu0 0.0
        %1056 = vmatprep.subr.mxu0 0.0
        %1057 = vmatpush1.msra.mxu0 0.0
        %1058 = vmatprep.subr.mxu0 0.0
        %1059 = vmatpush1.msra.mxu0 0.0
        %1060 = vmatprep.subr.mxu0 0.0
        %1061 = vmatpush1.msra.mxu0 0.0
        %1062 = vmatprep.subr.mxu0 0.0
        %1063 = vmatpush1.msra.mxu0 0.0
        %1064 = vmatprep.subr.mxu0 0.0
        %1065 = vmatpush1.msra.mxu0 0.0
        %1066 = vmatprep.subr.mxu0 0.0
        %1067 = vmatpush1.msra.mxu0 0.0
        %1068 = vmatprep.subr.mxu0 0.0
        %1069 = vmatpush1.msra.mxu0 0.0
        %1070 = vmatprep.subr.mxu0 0.0
        %1071 = vmatpush1.msra.mxu0 0.0
        %1072 = vmatprep.subr.mxu0 0.0
        %1073 = vmatpush1.msra.mxu0 0.0
        %1074 = vmatprep.subr.mxu0 0.0
        %1075 = vmatpush1.msra.mxu0 0.0
        %1076 = vmatprep.subr.mxu0 0.0
        %1077 = vmatpush1.msra.mxu0 0.0
        %1078 = vmatprep.subr.mxu0 0.0
        %1079 = vmatpush1.msra.mxu0 %v1040
        %1080 = vmatprep.subr.mxu0 0.0
        %1081 = vmatpush2.msra.mxu0 0.0
        %1082 = vmatprep.subr.mxu0 0.0
        %1083 = vmatpush2.msra.mxu0 0.0
        %1084 = vmatprep.subr.mxu0 0.0
        %1085 = vmatpush2.msra.mxu0 0.0
        %1086 = vmatprep.subr.mxu0 0.0
        %1087 = vmatpush2.msra.mxu0 0.0
        %1088 = vmatprep.subr.mxu0 0.0
        %1089 = vmatpush2.msra.mxu0 0.0
        %1090 = vmatprep.subr.mxu0 0.0
        %1091 = vmatpush2.msra.mxu0 0.0
        %1092 = vmatprep.subr.mxu0 0.0
        %1093 = vmatpush2.msra.mxu0 0.0
        %1094 = vmatprep.subr.mxu0 0.0
        %1095 = vmatpush2.msra.mxu0 0.0
        %1096 = vmatprep.subr.mxu0 0.0
        %1097 = vmatpush2.msra.mxu0 0.0
        %1098 = vmatprep.subr.mxu0 0.0
        %1099 = vmatpush2.msra.mxu0 0.0
        %1100 = vmatprep.subr.mxu0 0.0
        %1101 = vmatpush2.msra.mxu0 0.0
        %1102 = vmatprep.subr.mxu0 0.0
        %1103 = vmatpush2.msra.mxu0 0.0
        %1104 = vmatprep.subr.mxu0 0.0
        %1105 = vmatpush2.msra.mxu0 0.0
        %1106 = vmatprep.subr.mxu0 0.0
        %1107 = vmatpush2.msra.mxu0 0.0
        %1108 = vmatprep.subr.mxu0 0.0
        %1109 = vmatpush2.msra.mxu0 0.0
        %1110 = vmatprep.subr.mxu0 0.0
        %1111 = vmatpush2.msra.mxu0 0.0
        %1112 = vmatprep.mubr.f32.mxu0 0.0
        %1113 = vmatmul.mubr.f32.gmra.mxu0 %v538
        %v1114 = vpop.f32.mrf.mxu0
        %v1115 = vadd.f32 0.0, %v1114
        %v1116 = vpop.f32.mrf.mxu0
        %1117 = vdwg.mxu0
        %v1118 = vrcp.pop %v1047
        %v1119 = vmul.f32 %v1115, %v1118
        %v1120 = vadd.f32 %v866, %v1119
        %v1122 = vlaneseq
        %v1123 = vshrl.u32 %v1122, 7
        %v1124 = vsub.s32 0, %v1123
        %v1125 = vrot.slane %v327, %v1124
        %v1131 = vunpack.c.l.b16 %v320
        %v1132 = vunpack.c.l.b16 %v321
        %v1133 = vunpack.c.l.b16 %v322
        %v1134 = vunpack.c.l.b16 %v323
        %v1135 = vpack.c.b16 %v1132, %v1131
        %v1136 = vpack.c.b16 %v1134, %v1133
        %1139 = vmatprep.subr.bf16.mxu0 0
        %1140 = vmatpush1.bf16.msra.mxu0 0
        %1141 = vmatprep.subr.bf16.mxu0 0
        %1142 = vmatpush1.bf16.msra.mxu0 0
        %1143 = vmatprep.subr.bf16.mxu0 0
        %1144 = vmatpush1.bf16.msra.mxu0 0
        %1145 = vmatprep.subr.bf16.mxu0 0
        %1146 = vmatpush1.bf16.msra.mxu0 0
        %1147 = vmatprep.subr.bf16.mxu0 0
        %1148 = vmatpush1.bf16.msra.mxu0 0
        %1149 = vmatprep.subr.bf16.mxu0 0
        %1150 = vmatpush1.bf16.msra.mxu0 0
        %1151 = vmatprep.subr.bf16.mxu0 0
        %1152 = vmatpush1.bf16.msra.mxu0 %v1136
        %1153 = vmatprep.subr.bf16.mxu0 0
        %1154 = vmatpush1.bf16.msra.mxu0 %v1135
        %1155 = vmatprep.subr.bf16.mxu0 0
        %1156 = vmatpush2.bf16.msra.mxu0 0
        %1157 = vmatprep.subr.bf16.mxu0 0
        %1158 = vmatpush2.bf16.msra.mxu0 0
        %1159 = vmatprep.subr.bf16.mxu0 0
        %1160 = vmatpush2.bf16.msra.mxu0 0
        %1161 = vmatprep.subr.bf16.mxu0 0
        %1162 = vmatpush2.bf16.msra.mxu0 0
        %1163 = vmatprep.subr.bf16.mxu0 0
        %1164 = vmatpush2.bf16.msra.mxu0 0
        %1165 = vmatprep.subr.bf16.mxu0 0
        %1166 = vmatpush2.bf16.msra.mxu0 0
        %1167 = vmatprep.subr.bf16.mxu0 0
        %1168 = vmatpush2.bf16.msra.mxu0 0
        %1169 = vmatprep.subr.bf16.mxu0 0
        %1170 = vmatpush2.bf16.msra.mxu0 0
        %1171 = vmatprep.mubr.bf16.mxu0 0
        %1172 = vmatmul.mubr.bf16.gmra.mxu0 %v368
        %v1173 = vpop.f32.mrf.mxu0
        %v1174 = vadd.f32 %v1125, %v1173
        %v1175 = vpop.f32.mrf.mxu0
        %v1176 = vpop.f32.mrf.mxu0
        %v1177 = vpop.f32.mrf.mxu0
        %1178 = vdwg.mxu0
        %v1180 = vlaneseq
        %v1181 = vshrl.u32 %v1180, 7
        %v1182 = vsub.s32 0, %v1181
        %v1183 = vrot.slane %v347, %v1182
        %v1189 = vunpack.c.l.b16 %v340
        %v1190 = vunpack.c.l.b16 %v341
        %v1191 = vunpack.c.l.b16 %v342
        %v1192 = vunpack.c.l.b16 %v343
        %v1193 = vpack.c.b16 %v1190, %v1189
        %v1194 = vpack.c.b16 %v1192, %v1191
        %1197 = vmatprep.subr.bf16.mxu0 0
        %1198 = vmatpush1.bf16.msra.mxu0 0
        %1199 = vmatprep.subr.bf16.mxu0 0
        %1200 = vmatpush1.bf16.msra.mxu0 0
        %1201 = vmatprep.subr.bf16.mxu0 0
        %1202 = vmatpush1.bf16.msra.mxu0 0
        %1203 = vmatprep.subr.bf16.mxu0 0
        %1204 = vmatpush1.bf16.msra.mxu0 0
        %1205 = vmatprep.subr.bf16.mxu0 0
        %1206 = vmatpush1.bf16.msra.mxu0 0
        %1207 = vmatprep.subr.bf16.mxu0 0
        %1208 = vmatpush1.bf16.msra.mxu0 0
        %1209 = vmatprep.subr.bf16.mxu0 0
        %1210 = vmatpush1.bf16.msra.mxu0 %v1194
        %1211 = vmatprep.subr.bf16.mxu0 0
        %1212 = vmatpush1.bf16.msra.mxu0 %v1193
        %1213 = vmatprep.subr.bf16.mxu0 0
        %1214 = vmatpush2.bf16.msra.mxu0 0
        %1215 = vmatprep.subr.bf16.mxu0 0
        %1216 = vmatpush2.bf16.msra.mxu0 0
        %1217 = vmatprep.subr.bf16.mxu0 0
        %1218 = vmatpush2.bf16.msra.mxu0 0
        %1219 = vmatprep.subr.bf16.mxu0 0
        %1220 = vmatpush2.bf16.msra.mxu0 0
        %1221 = vmatprep.subr.bf16.mxu0 0
        %1222 = vmatpush2.bf16.msra.mxu0 0
        %1223 = vmatprep.subr.bf16.mxu0 0
        %1224 = vmatpush2.bf16.msra.mxu0 0
        %1225 = vmatprep.subr.bf16.mxu0 0
        %1226 = vmatpush2.bf16.msra.mxu0 0
        %1227 = vmatprep.subr.bf16.mxu0 0
        %1228 = vmatpush2.bf16.msra.mxu0 0
        %1229 = vmatprep.mubr.bf16.mxu0 0
        %1230 = vmatmul.mubr.bf16.gmra.mxu0 %v429
        %v1231 = vpop.f32.mrf.mxu0
        %v1232 = vadd.f32 %v1183, %v1231
        %v1233 = vpop.f32.mrf.mxu0
        %v1234 = vpop.f32.mrf.mxu0
        %v1235 = vpop.f32.mrf.mxu0
        %1236 = vdwg.mxu0
        %v1237 = vpack.c.bf16 %v1232, %v1232
        %v1238 = vpack.c.bf16 %v1174, %v1174
        %v1240 = vsel %vm473, %v1237, 0
        %v1243 = vsel %vm473, %v1238, 0
        %1245 = vmatprep.subr.bf16.mxu0 0
        %1246 = vmatpush1.bf16.xpose.msra.mxu0 0
        %1247 = vmatprep.subr.bf16.mxu0 0
        %1248 = vmatpush1.bf16.xpose.msra.mxu0 0
        %1249 = vmatprep.subr.bf16.mxu0 0
        %1250 = vmatpush1.bf16.xpose.msra.mxu0 0
        %1251 = vmatprep.subr.bf16.mxu0 0
        %1252 = vmatpush1.bf16.xpose.msra.mxu0 0
        %1253 = vmatprep.subr.bf16.mxu0 0
        %1254 = vmatpush1.bf16.xpose.msra.mxu0 0
        %1255 = vmatprep.subr.bf16.mxu0 0
        %1256 = vmatpush1.bf16.xpose.msra.mxu0 0
        %1257 = vmatprep.subr.bf16.mxu0 0
        %1258 = vmatpush1.bf16.xpose.msra.mxu0 0
        %1259 = vmatprep.subr.bf16.mxu0 0
        %1260 = vmatpush1.bf16.xpose.msra.mxu0 %v1243
        %1261 = vmatprep.subr.bf16.mxu0 0
        %1262 = vmatpush2.bf16.xpose.msra.mxu0 0
        %1263 = vmatprep.subr.bf16.mxu0 0
        %1264 = vmatpush2.bf16.xpose.msra.mxu0 0
        %1265 = vmatprep.subr.bf16.mxu0 0
        %1266 = vmatpush2.bf16.xpose.msra.mxu0 0
        %1267 = vmatprep.subr.bf16.mxu0 0
        %1268 = vmatpush2.bf16.xpose.msra.mxu0 0
        %1269 = vmatprep.subr.bf16.mxu0 0
        %1270 = vmatpush2.bf16.xpose.msra.mxu0 0
        %1271 = vmatprep.subr.bf16.mxu0 0
        %1272 = vmatpush2.bf16.xpose.msra.mxu0 0
        %1273 = vmatprep.subr.bf16.mxu0 0
        %1274 = vmatpush2.bf16.xpose.msra.mxu0 0
        %1275 = vmatprep.subr.bf16.mxu0 0
        %1276 = vmatpush2.bf16.xpose.msra.mxu0 0
        %1277 = vmatprep.mubr.bf16.mxu0 0
        %1278 = vmatmul.mubr.bf16.gmra.mxu0 %v1240
        %v1279 = vpop.f32.mrf.mxu0
        %v1280 = vadd.f32 0.0, %v1279
        %v1281 = vpop.f32.mrf.mxu0
        %v1282 = vpop.f32.mrf.mxu0
        %v1283 = vpop.f32.mrf.mxu0
        %1284 = vdwg.mxu0
        %v1285 = vsel %vm473, %v1280, -inf
        %v1286 = vrot.slane %v1285, 4
        %v1287 = vmax.f32 %v1285, %v1286
        %v1288 = vrot.slane %v1287, 2
        %v1289 = vmax.f32 %v1287, %v1288
        %v1290 = vrot.slane %v1289, 1
        %v1291 = vmax.f32 %v1289, %v1290
        %v1292 = vsub.f32 %v1280, %v1291
        %v1293 = vmul.f32 %v1292, 1.442695
        %v1294 = vpow.pop %v1293
        %v1295 = vsel %vm473, %v1294, 0.0
        %v1296 = vrot.slane %v1295, 4
        %v1297 = vadd.f32 %v1295, %v1296
        %v1298 = vrot.slane %v1297, 2
        %v1299 = vadd.f32 %v1297, %v1298
        %v1300 = vrot.slane %v1299, 1
        %v1301 = vadd.f32 %v1299, %v1300
        %1302 = vmatprep.subr.mxu0 0.0
        %1303 = vmatpush1.msra.mxu0 0.0
        %1304 = vmatprep.subr.mxu0 0.0
        %1305 = vmatpush1.msra.mxu0 0.0
        %1306 = vmatprep.subr.mxu0 0.0
        %1307 = vmatpush1.msra.mxu0 0.0
        %1308 = vmatprep.subr.mxu0 0.0
        %1309 = vmatpush1.msra.mxu0 0.0
        %1310 = vmatprep.subr.mxu0 0.0
        %1311 = vmatpush1.msra.mxu0 0.0
        %1312 = vmatprep.subr.mxu0 0.0
        %1313 = vmatpush1.msra.mxu0 0.0
        %1314 = vmatprep.subr.mxu0 0.0
        %1315 = vmatpush1.msra.mxu0 0.0
        %1316 = vmatprep.subr.mxu0 0.0
        %1317 = vmatpush1.msra.mxu0 0.0
        %1318 = vmatprep.subr.mxu0 0.0
        %1319 = vmatpush1.msra.mxu0 0.0
        %1320 = vmatprep.subr.mxu0 0.0
        %1321 = vmatpush1.msra.mxu0 0.0
        %1322 = vmatprep.subr.mxu0 0.0
        %1323 = vmatpush1.msra.mxu0 0.0
        %1324 = vmatprep.subr.mxu0 0.0
        %1325 = vmatpush1.msra.mxu0 0.0
        %1326 = vmatprep.subr.mxu0 0.0
        %1327 = vmatpush1.msra.mxu0 0.0
        %1328 = vmatprep.subr.mxu0 0.0
        %1329 = vmatpush1.msra.mxu0 0.0
        %1330 = vmatprep.subr.mxu0 0.0
        %1331 = vmatpush1.msra.mxu0 0.0
        %1332 = vmatprep.subr.mxu0 0.0
        %1333 = vmatpush1.msra.mxu0 %v1294
        %1334 = vmatprep.subr.mxu0 0.0
        %1335 = vmatpush2.msra.mxu0 0.0
        %1336 = vmatprep.subr.mxu0 0.0
        %1337 = vmatpush2.msra.mxu0 0.0
        %1338 = vmatprep.subr.mxu0 0.0
        %1339 = vmatpush2.msra.mxu0 0.0
        %1340 = vmatprep.subr.mxu0 0.0
        %1341 = vmatpush2.msra.mxu0 0.0
        %1342 = vmatprep.subr.mxu0 0.0
        %1343 = vmatpush2.msra.mxu0 0.0
        %1344 = vmatprep.subr.mxu0 0.0
        %1345 = vmatpush2.msra.mxu0 0.0
        %1346 = vmatprep.subr.mxu0 0.0
        %1347 = vmatpush2.msra.mxu0 0.0
        %1348 = vmatprep.subr.mxu0 0.0
        %1349 = vmatpush2.msra.mxu0 0.0
        %1350 = vmatprep.subr.mxu0 0.0
        %1351 = vmatpush2.msra.mxu0 0.0
        %1352 = vmatprep.subr.mxu0 0.0
        %1353 = vmatpush2.msra.mxu0 0.0
        %1354 = vmatprep.subr.mxu0 0.0
        %1355 = vmatpush2.msra.mxu0 0.0
        %1356 = vmatprep.subr.mxu0 0.0
        %1357 = vmatpush2.msra.mxu0 0.0
        %1358 = vmatprep.subr.mxu0 0.0
        %1359 = vmatpush2.msra.mxu0 0.0
        %1360 = vmatprep.subr.mxu0 0.0
        %1361 = vmatpush2.msra.mxu0 0.0
        %1362 = vmatprep.subr.mxu0 0.0
        %1363 = vmatpush2.msra.mxu0 0.0
        %1364 = vmatprep.subr.mxu0 0.0
        %1365 = vmatpush2.msra.mxu0 0.0
        %1366 = vmatprep.mubr.f32.mxu0 0.0
        %1367 = vmatmul.mubr.f32.gmra.mxu0 %v538
        %v1368 = vpop.f32.mrf.mxu0
        %v1369 = vadd.f32 0.0, %v1368
        %v1370 = vpop.f32.mrf.mxu0
        %1371 = vdwg.mxu0
        %v1372 = vrcp.pop %v1301
        %v1373 = vmul.f32 %v1369, %v1372
        %v1374 = vadd.f32 %v1120, %v1373
        %v1375 = vmul.f32 %v1374, 0.25
        %vm1376 = vcmask 57344
        %1377 = vst.msk [vmem:[%s292] sm:$0x1] %vm1376, %v1375
        %s1378 = sand.u32 %s191, 1
        %s1379 = scalar_lea.sflag [#allocation3], %s1378
        %s1380 = sand.u32 %s191, 1
        %s1381 = scalar_lea.vmem [#allocation2], %s1380
        // Predicated region
        $region49: #{tpu_custom_call.1} parent=47 // pred_check
          %p1382 = pneg %p201
        $region50: #{tpu_custom_call.1} parent=47 // pred_check_branch
          %1384 = sbr.rel (%p1382) target = $region52
        $region51: #{tpu_custom_call.1} parent=47 // pred_region
          %s1386 = ssub.s32 16, 16
          %1387 = vsyncadd %s1379, %s1386
          %s1388 = smul.addr %s21, 16
          %s1389 = scalar_lea.hbm %s7, %s1388
          %s1391 = sshll.u32 %s1381, 4
          %s1392 = int_to_ptr.vmem [resolvable:$true] %s1391
          %1394 = dma.vmem_to_hbm [thread:$0]  %s1392, 16, %s1389, %s1379
        $region52: #{tpu_custom_call.1} parent=47 // pred_fallthru
          _
      $region48: #{tpu_custom_call.1} parent=5 // pred_fallthru
        _
      %p1395 = scmp.le.s32.totalorder 2, %s16
      // Predicated region
      $region53: #{tpu_custom_call.1} parent=5 // pred_check
        %p1396 = pneg %p1395
      $region54: #{tpu_custom_call.1} parent=5 // pred_check_branch
        %1398 = sbr.rel (%p1396) target = $region56
      $region55: #{tpu_custom_call.1} parent=5 // pred_region
        %s1399 = ssub.s32 %s16, 2
        // Predicated region
        $region57: #{tpu_custom_call.1} parent=55 // pred_check
          %p1400 = pneg %p207
        $region58: #{tpu_custom_call.1} parent=55 // pred_check_branch
          %1402 = sbr.rel (%p1400) target = $region60
        $region59: #{tpu_custom_call.1} parent=55 // pred_region
          %s1403 = sand.u32 %s192, 1
          %s1404 = scalar_lea.sflag [#allocation3], %s1403
          %s1405 = sand.u32 %s192, 1
          %s1406 = scalar_lea.vmem [#allocation2], %s1405
          %1407 = dma.done %s1404, 16
        $region60: #{tpu_custom_call.1} parent=55 // pred_fallthru
          _
      $region56: #{tpu_custom_call.1} parent=5 // pred_fallthru
        _
    $region6: #{tpu_custom_call.1} parent=1 // loop_footer
      %s20 = sadd.s32 1, %s16
    $region7: #{tpu_custom_call.1} parent=1 // loop_footer_branch
      %15 = sbr.rel target = $region3
    $region8: #{tpu_custom_call.1} parent=1 // loop_exit
      _
    %1408 = vsyncpa [#allocation3], 1
    %s1409 = scalar_lea.sflag [#allocation3], 1
    %1410 = vsyncpa %s1409, 1

</llo_original>
